<compile_context>
chip_gen: v6e
topology: v6e:2x2x1
jax: 0.10.0
libtpu: 0.0.40
codegen_flags: <defaults>
</compile_context>

<pallas_src>
import jax
import jax.numpy as jnp
from jax import lax
from jax.experimental import pallas as pl
from jax.experimental.pallas import tpu as pltpu


def _make_kernel(n_mul, H, W, Cin, Cout_p, KH, KW, stride, pad, Ho, Wo,
                 matmul_dtype):
    Hp = H + 2 * pad
    Wp = W + 2 * pad

    def kernel(*refs):
        x_ref = refs[0]                         # (1, H, W, Cin)
        m_refs = refs[1:1 + n_mul]              # (1, Hm, Wm, Cm) each
        w_ref = refs[1 + n_mul]                 # (KW*KH*Cin, Cout_p)
        o_ref = refs[2 + n_mul]                 # (1, Ho, Wo, Cout_p)
        xp_ref = refs[3 + n_mul]                # VMEM scratch (Hp, Wp, Cin) f32

        # ---- fused elementwise multiplies (f32, broadcast in-kernel) -------
        xm = x_ref[...]                         # (1, H, W, Cin)
        for m_ref in m_refs:
            xm = xm * m_ref[...]                # jnp broadcasting on the VPU
        xm = xm[0]                              # (H, W, Cin)

        # ---- padding: zero only the border; interior overwritten each step -
        if pad > 0:
            row = jnp.zeros((pad, Wp, Cin), xp_ref.dtype)
            col = jnp.zeros((H, pad, Cin), xp_ref.dtype)
            xp_ref[0:pad] = row
            xp_ref[pad + H:Hp] = row
            xp_ref[pad:pad + H, 0:pad] = col
            xp_ref[pad:pad + H, pad + W:Wp] = col
        xp_ref[pad:pad + H, pad:pad + W, :] = xm

        # ---- im2col: one (Ho*Wo, KW*KH*Cin) patch matrix --------------------
        # kw outer so the sublane-unaligned W slice happens once per kw;
        # kh slices are leading-dim offsets (free).
        patches = []
        for kw in range(KW):
            if stride == 1:
                xw = xp_ref[:, kw:kw + Wo, :]           # (Hp, Wo, Cin)
            else:
                xw = None
            for kh in range(KH):
                if stride == 1:
                    win = xw[kh:kh + Ho]                # (Ho, Wo, Cin)
                else:
                    win = xp_ref[pl.ds(kh, Ho, stride=stride),
                                 pl.ds(kw, Wo, stride=stride), :]
                patches.append(win.reshape(Ho * Wo, Cin))
        patch = jnp.concatenate(patches, axis=-1)       # (Ho*Wo, KW*KH*Cin)

        # ---- single MXU matmul, bf16 operands, f32 accumulation -------------
        out2d = jnp.dot(patch.astype(matmul_dtype), w_ref[...],
                        preferred_element_type=jnp.float32)
        o_ref[0] = out2d.reshape(Ho, Wo, Cout_p).astype(o_ref.dtype)

    return kernel


def multiply_conv(x, concat_list, weight, *, stride=1, padding=1,
                  matmul_dtype=jnp.bfloat16):
    """x: (B, Cin, H, W); concat_list: tensor or list of tensors broadcastable
    to x; weight: (Cout, Cin, KH, KW).  Returns (B, Cout, Ho, Wo) float32."""
    if not isinstance(concat_list, (list, tuple)):
        concat_list = [concat_list]
    concat_list = list(concat_list)

    B, Cin, H, W = x.shape
    Cout, Cin_w, KH, KW = weight.shape
    assert Cin_w == Cin, "groups=1 only"
    S, P = int(stride), int(padding)
    Ho = (H + 2 * P - KH) // S + 1
    Wo = (W + 2 * P - KW) // S + 1

    # Lane-dense output: pad Cout up to 128 when smaller; sliced off outside.
    Cout_p = 128 if Cout < 128 else Cout

    # Layout plumbing only: NCHW -> NHWC so channels land on the lane axis.
    x_nhwc = jnp.transpose(x.astype(jnp.float32), (0, 2, 3, 1))

    # Multipliers at their natural (broadcastable) size; broadcast in-kernel.
    def prep_mul(m):
        m = jnp.asarray(m, jnp.float32)
        assert m.ndim <= x.ndim
        shp = (1,) * (x.ndim - m.ndim) + tuple(m.shape)
        m4 = m.reshape(shp)
        if any(s not in (1, xs) for s, xs in zip(shp, x.shape)):
            m4 = jnp.broadcast_to(m4, x.shape)          # fallback, rare
        return jnp.transpose(m4, (0, 2, 3, 1))          # NHWC, 1-dims kept

    m_nhwc = [prep_mul(m) for m in concat_list]
    n_mul = len(m_nhwc)

    # Weight OIHW -> (KW, KH, Cin, Cout) -> (KW*KH*Cin, Cout_p), matching the
    # in-kernel patch column order (kw slowest, then kh, then cin).
    w2d = jnp.transpose(weight.astype(jnp.float32), (3, 2, 1, 0))
    w2d = w2d.reshape(KW * KH * Cin, Cout)
    if Cout_p != Cout:
        w2d = jnp.pad(w2d, ((0, 0), (0, Cout_p - Cout)))
    w2d = w2d.astype(matmul_dtype)

    kernel = _make_kernel(n_mul, H, W, Cin, Cout_p, KH, KW, S, P, Ho, Wo,
                          matmul_dtype)

    def mul_spec(m):
        Bm, Hm, Wm, Cm = m.shape
        if Bm == B:
            idx = lambda b: (b, 0, 0, 0)
        else:
            idx = lambda b: (0, 0, 0, 0)
        return pl.BlockSpec((1, Hm, Wm, Cm), idx)

    in_specs = ([pl.BlockSpec((1, H, W, Cin), lambda b: (b, 0, 0, 0))]
                + [mul_spec(m) for m in m_nhwc]
                + [pl.BlockSpec((KW * KH * Cin, Cout_p), lambda b: (0, 0))])

    # VMEM budget from the actual per-step footprint (double-buffered I/O +
    # scratch + im2col patch), with headroom; capped at v7x physical 64 MiB.
    w_item = jnp.dtype(matmul_dtype).itemsize
    footprint = (
        2 * H * W * Cin * 4
        + sum(2 * (m.size // B if m.shape[0] == B else m.size) * 4
              for m in m_nhwc)
        + 2 * w2d.size * w_item
        + 2 * Ho * Wo * Cout_p * 4
        + (H + 2 * P) * (W + 2 * P) * Cin * 4
        + Ho * Wo * KW * KH * Cin * 4)
    vmem_limit = int(min(64 * 1024 * 1024,
                         max(32 * 1024 * 1024, 4 * footprint)))

    out_nhwc = pl.pallas_call(
        kernel,
        out_shape=jax.ShapeDtypeStruct((B, Ho, Wo, Cout_p), jnp.float32),
        grid=(B,),
        in_specs=in_specs,
        out_specs=pl.BlockSpec((1, Ho, Wo, Cout_p), lambda b: (b, 0, 0, 0)),
        scratch_shapes=[pltpu.VMEM((H + 2 * P, W + 2 * P, Cin), jnp.float32)],
        compiler_params=pltpu.CompilerParams(
            dimension_semantics=("parallel",),
            vmem_limit_bytes=vmem_limit),
    )(x_nhwc, *m_nhwc, w2d)

    out = out_nhwc[..., :Cout] if Cout_p != Cout else out_nhwc
    return jnp.transpose(out, (0, 3, 1, 2))


def _reference(x, concat_list, weight, *, stride=1, padding=1,
               conv_dtype=jnp.float32):
    """Pure-JAX reference: f32 multiply chain, then lax.conv (NCHW/OIHW).
    conv_dtype lets us build a reference with bf16 conv operands (matching
    the kernel's MXU numerics) as well as the exact f32 one."""
    if not isinstance(concat_list, (list, tuple)):
        concat_list = [concat_list]
    out = x.astype(jnp.float32)
    for m in concat_list:
        out = out * jnp.asarray(m, jnp.float32)
    return lax.conv_general_dilated(
        out.astype(conv_dtype), weight.astype(conv_dtype),
        window_strides=(stride, stride),
        padding=((padding, padding), (padding, padding)),
        dimension_numbers=('NCHW', 'OIHW', 'NCHW'),
        preferred_element_type=jnp.float32)


def _check(y, x, ms, w, s, p):
    # Tight check against a reference with the same (bf16 operand / f32
    # accumulate) numerics; loose check against the exact f32 reference.
    y_bf = _reference(x, ms, w, stride=s, padding=p, conv_dtype=jnp.bfloat16)
    y_f32 = _reference(x, ms, w, stride=s, padding=p, conv_dtype=jnp.float32)
    assert jnp.allclose(y, y_bf, atol=2e-3, rtol=2e-3), \
        float(jnp.max(jnp.abs(y - y_bf)))
    assert jnp.allclose(y, y_f32, atol=1e-1, rtol=2e-2), \
        float(jnp.max(jnp.abs(y - y_f32)))


if __name__ == "__main__":
    key = jax.random.PRNGKey(0)
    kx, k1, k2, k3, kw = jax.random.split(key, 5)

    B, Cin, H, W = 2, 4, 16, 16
    Cout, K, S, P = 4, 3, 1, 1

    x = jax.random.normal(kx, (B, Cin, H, W), dtype=jnp.float32)
    m1 = jax.random.normal(k1, (B, Cin, H, W), dtype=jnp.float32)
    m2 = jax.random.normal(k2, (B, Cin, H, W), dtype=jnp.float32)
    scale = jax.random.normal(k3, (1, Cin, 1, 1), dtype=jnp.float32)
    weight = 0.1 * jax.random.normal(kw, (Cout, Cin, K, K), dtype=jnp.float32)

    # list-of-tensors path (two full-size multipliers)
    y = multiply_conv(x, [m1, m2], weight, stride=S, padding=P)
    y = jax.block_until_ready(y)
    assert y.shape == (B, Cout, H, W), y.shape
    _check(y, x, [m1, m2], weight, S, P)

    # single-tensor path (forward's else branch)
    y1 = multiply_conv(x, m1, weight, stride=S, padding=P)
    y1 = jax.block_until_ready(y1)
    _check(y1, x, m1, weight, S, P)

    # list path with a small (per-channel) multiplier: broadcast in-kernel,
    # no full-size copy materialized in HBM.
    y2 = multiply_conv(x, [m1, scale], weight, stride=S, padding=P)
    y2 = jax.block_until_ready(y2)
    _check(y2, x, [m1, scale], weight, S, P)

    print("KERNEL_OK")
</pallas_src>

<mosaic_0001>
module attributes {stable_mosaic.version = 11 : i64} {
  func.func @kernel(%arg0: i32, %arg1: memref<1x16x16x4xf32, #tpu.memory_space<vmem>>, %arg2: memref<1x16x16x4xf32, #tpu.memory_space<vmem>>, %arg3: memref<1x16x16x4xf32, #tpu.memory_space<vmem>>, %arg4: memref<36x128xbf16, #tpu.memory_space<vmem>>, %arg5: memref<1x16x16x128xf32, #tpu.memory_space<vmem>>, %arg6: memref<18x18x4xf32, #tpu.memory_space<vmem>>) attributes {dimension_semantics = [#tpu.dimension_semantics<parallel>], iteration_bounds = array<i64: 2>, scalar_prefetch = 0 : i64, scratch_operands = 1 : i64, tpu.core_type = #tpu.core_type<tc>, window_params = [{transform_indices = @transform_0, window_bounds = array<i64: 1, 16, 16, 4>}, {transform_indices = @transform_1, window_bounds = array<i64: 1, 16, 16, 4>}, {transform_indices = @transform_2, window_bounds = array<i64: 1, 16, 16, 4>}, {pipeline_mode = #tpu.pipeline_mode<synchronous>, transform_indices = @transform_3, window_bounds = array<i64: 36, 128>}, {transform_indices = @transform_4, window_bounds = array<i64: 1, 16, 16, 128>}]} {
    %c0 = arith.constant 0 : index
    %c0_0 = arith.constant 0 : index
    %c0_1 = arith.constant 0 : index
    %c0_2 = arith.constant 0 : index
    %0 = vector.load %arg1[%c0, %c0_0, %c0_1, %c0_2] : memref<1x16x16x4xf32, #tpu.memory_space<vmem>>, vector<1x16x16x4xf32>
    %c0_3 = arith.constant 0 : index
    %c0_4 = arith.constant 0 : index
    %c0_5 = arith.constant 0 : index
    %c0_6 = arith.constant 0 : index
    %1 = vector.load %arg2[%c0_3, %c0_4, %c0_5, %c0_6] : memref<1x16x16x4xf32, #tpu.memory_space<vmem>>, vector<1x16x16x4xf32>
    %2 = arith.mulf %0, %1 : vector<1x16x16x4xf32>
    %c0_7 = arith.constant 0 : index
    %c0_8 = arith.constant 0 : index
    %c0_9 = arith.constant 0 : index
    %c0_10 = arith.constant 0 : index
    %3 = vector.load %arg3[%c0_7, %c0_8, %c0_9, %c0_10] : memref<1x16x16x4xf32, #tpu.memory_space<vmem>>, vector<1x16x16x4xf32>
    %4 = arith.mulf %2, %3 : vector<1x16x16x4xf32>
    %5 = vector.shape_cast %4 : vector<1x16x16x4xf32> to vector<16x16x4xf32>
    %cst = arith.constant 0.000000e+00 : f32
    %6 = vector.broadcast %cst : f32 to vector<1x18x4xf32>
    %cst_11 = arith.constant 0.000000e+00 : f32
    %7 = vector.broadcast %cst_11 : f32 to vector<16x1x4xf32>
    %c0_12 = arith.constant 0 : index
    %c0_13 = arith.constant 0 : index
    %c0_14 = arith.constant 0 : index
    %8 = vector.load %arg6[%c0_12, %c0_13, %c0_14] : memref<18x18x4xf32, #tpu.memory_space<vmem>>, vector<1x18x4xf32>
    tpu.vector_store %arg6[%c0_12, %c0_13, %c0_14], %6 {strides = array<i32>} : memref<18x18x4xf32, #tpu.memory_space<vmem>>, vector<1x18x4xf32>,
    %c17 = arith.constant 17 : index
    %c0_15 = arith.constant 0 : index
    %c0_16 = arith.constant 0 : index
    %9 = vector.load %arg6[%c17, %c0_15, %c0_16] : memref<18x18x4xf32, #tpu.memory_space<vmem>>, vector<1x18x4xf32>
    tpu.vector_store %arg6[%c17, %c0_15, %c0_16], %6 {strides = array<i32>} : memref<18x18x4xf32, #tpu.memory_space<vmem>>, vector<1x18x4xf32>,
    %c1 = arith.constant 1 : index
    %c0_17 = arith.constant 0 : index
    %c0_18 = arith.constant 0 : index
    %10 = vector.load %arg6[%c1, %c0_17, %c0_18] : memref<18x18x4xf32, #tpu.memory_space<vmem>>, vector<16x1x4xf32>
    tpu.vector_store %arg6[%c1, %c0_17, %c0_18], %7 {strides = array<i32>} : memref<18x18x4xf32, #tpu.memory_space<vmem>>, vector<16x1x4xf32>,
    %c1_19 = arith.constant 1 : index
    %c17_20 = arith.constant 17 : index
    %c0_21 = arith.constant 0 : index
    %11 = vector.load %arg6[%c1_19, %c17_20, %c0_21] : memref<18x18x4xf32, #tpu.memory_space<vmem>>, vector<16x1x4xf32>
    tpu.vector_store %arg6[%c1_19, %c17_20, %c0_21], %7 {strides = array<i32>} : memref<18x18x4xf32, #tpu.memory_space<vmem>>, vector<16x1x4xf32>,
    %c1_22 = arith.constant 1 : index
    %c1_23 = arith.constant 1 : index
    %c0_24 = arith.constant 0 : index
    %12 = vector.load %arg6[%c1_22, %c1_23, %c0_24] : memref<18x18x4xf32, #tpu.memory_space<vmem>>, vector<16x16x4xf32>
    tpu.vector_store %arg6[%c1_22, %c1_23, %c0_24], %5 {strides = array<i32>} : memref<18x18x4xf32, #tpu.memory_space<vmem>>, vector<16x16x4xf32>,
    %c0_25 = arith.constant 0 : index
    %c0_26 = arith.constant 0 : index
    %c0_27 = arith.constant 0 : index
    %13 = vector.load %arg6[%c0_25, %c0_26, %c0_27] : memref<18x18x4xf32, #tpu.memory_space<vmem>>, vector<18x16x4xf32>
    %14 = vector.extract_strided_slice %13 {offsets = [0, 0, 0], sizes = [16, 16, 4], strides = [1, 1, 1]} : vector<18x16x4xf32> to vector<16x16x4xf32>
    %15 = vector.shape_cast %14 : vector<16x16x4xf32> to vector<256x4xf32>
    %16 = vector.extract_strided_slice %13 {offsets = [1, 0, 0], sizes = [16, 16, 4], strides = [1, 1, 1]} : vector<18x16x4xf32> to vector<16x16x4xf32>
    %17 = vector.shape_cast %16 : vector<16x16x4xf32> to vector<256x4xf32>
    %18 = vector.extract_strided_slice %13 {offsets = [2, 0, 0], sizes = [16, 16, 4], strides = [1, 1, 1]} : vector<18x16x4xf32> to vector<16x16x4xf32>
    %19 = vector.shape_cast %18 : vector<16x16x4xf32> to vector<256x4xf32>
    %c0_28 = arith.constant 0 : index
    %c1_29 = arith.constant 1 : index
    %c0_30 = arith.constant 0 : index
    %20 = vector.load %arg6[%c0_28, %c1_29, %c0_30] : memref<18x18x4xf32, #tpu.memory_space<vmem>>, vector<18x16x4xf32>
    %21 = vector.extract_strided_slice %20 {offsets = [0, 0, 0], sizes = [16, 16, 4], strides = [1, 1, 1]} : vector<18x16x4xf32> to vector<16x16x4xf32>
    %22 = vector.shape_cast %21 : vector<16x16x4xf32> to vector<256x4xf32>
    %23 = vector.extract_strided_slice %20 {offsets = [1, 0, 0], sizes = [16, 16, 4], strides = [1, 1, 1]} : vector<18x16x4xf32> to vector<16x16x4xf32>
    %24 = vector.shape_cast %23 : vector<16x16x4xf32> to vector<256x4xf32>
    %25 = vector.extract_strided_slice %20 {offsets = [2, 0, 0], sizes = [16, 16, 4], strides = [1, 1, 1]} : vector<18x16x4xf32> to vector<16x16x4xf32>
    %26 = vector.shape_cast %25 : vector<16x16x4xf32> to vector<256x4xf32>
    %c0_31 = arith.constant 0 : index
    %c2 = arith.constant 2 : index
    %c0_32 = arith.constant 0 : index
    %27 = vector.load %arg6[%c0_31, %c2, %c0_32] : memref<18x18x4xf32, #tpu.memory_space<vmem>>, vector<18x16x4xf32>
    %28 = vector.extract_strided_slice %27 {offsets = [0, 0, 0], sizes = [16, 16, 4], strides = [1, 1, 1]} : vector<18x16x4xf32> to vector<16x16x4xf32>
    %29 = vector.shape_cast %28 : vector<16x16x4xf32> to vector<256x4xf32>
    %30 = vector.extract_strided_slice %27 {offsets = [1, 0, 0], sizes = [16, 16, 4], strides = [1, 1, 1]} : vector<18x16x4xf32> to vector<16x16x4xf32>
    %31 = vector.shape_cast %30 : vector<16x16x4xf32> to vector<256x4xf32>
    %32 = vector.extract_strided_slice %27 {offsets = [2, 0, 0], sizes = [16, 16, 4], strides = [1, 1, 1]} : vector<18x16x4xf32> to vector<16x16x4xf32>
    %33 = vector.shape_cast %32 : vector<16x16x4xf32> to vector<256x4xf32>
    %34 = tpu.concatenate %15, %17, %19, %22, %24, %26, %29, %31, %33 in 1 : vector<256x4xf32>, vector<256x4xf32>, vector<256x4xf32>, vector<256x4xf32>, vector<256x4xf32>, vector<256x4xf32>, vector<256x4xf32>, vector<256x4xf32>, vector<256x4xf32> -> vector<256x36xf32>
    %35 = arith.truncf %34 : vector<256x36xf32> to vector<256x36xbf16>
    %c0_33 = arith.constant 0 : index
    %c0_34 = arith.constant 0 : index
    %36 = vector.load %arg4[%c0_33, %c0_34] : memref<36x128xbf16, #tpu.memory_space<vmem>>, vector<36x128xbf16>
    %cst_35 = arith.constant dense<0.000000e+00> : vector<256x128xf32>
    %37 = tpu.matmul %35, %36, %cst_35 {dimension_numbers = #tpu.dot_dimension_numbers<[1], [0], [0], [1], [0, 0, 1, 1], [], []>} : vector<256x36xbf16>, vector<36x128xbf16>, vector<256x128xf32> -> vector<256x128xf32>
    %38 = vector.shape_cast %37 : vector<256x128xf32> to vector<16x16x128xf32>
    %c0_36 = arith.constant 0 : index
    %c0_37 = arith.constant 0 : index
    %c0_38 = arith.constant 0 : index
    %c0_39 = arith.constant 0 : index
    %39 = vector.load %arg5[%c0_36, %c0_37, %c0_38, %c0_39] : memref<1x16x16x128xf32, #tpu.memory_space<vmem>>, vector<1x16x16x128xf32>
    %40 = vector.shape_cast %39 : vector<1x16x16x128xf32> to vector<16x16x128xf32>
    %41 = vector.shape_cast %38 : vector<16x16x128xf32> to vector<1x16x16x128xf32>
    tpu.vector_store %arg5[%c0_36, %c0_37, %c0_38, %c0_39], %41 {strides = array<i32>} : memref<1x16x16x128xf32, #tpu.memory_space<vmem>>, vector<1x16x16x128xf32>,
    return
  }
  func.func @transform_0(%arg0: i32) -> (i32, i32, i32, i32) {
    %c0_i32 = arith.constant 0 : i32
    %c0_i32_0 = arith.constant 0 : i32
    %c0_i32_1 = arith.constant 0 : i32
    %c0_i32_2 = arith.constant 0 : i32
    return %arg0, %c0_i32, %c0_i32_0, %c0_i32_1 : i32, i32, i32, i32
  }
  func.func @transform_1(%arg0: i32) -> (i32, i32, i32, i32) {
    %c0_i32 = arith.constant 0 : i32
    %c0_i32_0 = arith.constant 0 : i32
    %c0_i32_1 = arith.constant 0 : i32
    %c0_i32_2 = arith.constant 0 : i32
    return %arg0, %c0_i32, %c0_i32_0, %c0_i32_1 : i32, i32, i32, i32
  }
  func.func @transform_2(%arg0: i32) -> (i32, i32, i32, i32) {
    %c0_i32 = arith.constant 0 : i32
    %c0_i32_0 = arith.constant 0 : i32
    %c0_i32_1 = arith.constant 0 : i32
    %c0_i32_2 = arith.constant 0 : i32
    return %arg0, %c0_i32, %c0_i32_0, %c0_i32_1 : i32, i32, i32, i32
  }
  func.func @transform_3(%arg0: i32) -> (i32, i32) {
    %c0_i32 = arith.constant 0 : i32
    %c0_i32_0 = arith.constant 0 : i32
    %c0_i32_1 = arith.constant 0 : i32
    return %c0_i32, %c0_i32_0 : i32, i32
  }
  func.func @transform_4(%arg0: i32) -> (i32, i32, i32, i32) {
    %c0_i32 = arith.constant 0 : i32
    %c0_i32_0 = arith.constant 0 : i32
    %c0_i32_1 = arith.constant 0 : i32
    %c0_i32_2 = arith.constant 0 : i32
    return %arg0, %c0_i32, %c0_i32_0, %c0_i32_1 : i32, i32, i32, i32
  }
}

</mosaic_0001>

<llo_original>
// kernel: tpu_custom_call.1
$region0: #{tpu_custom_call.1}
  #allocation0 [shape = 'u32[]', space=smem, size = 0x4, offset = 0x4, fixed_abs, tag = 'smem constant byte address 0x4 - core index']
  #allocation1 [shape = 'u32[144,128]{1,0:T(1,128)}', space=vmem, size = 0x12000, scoped, tag = 'internal scratch']
  #allocation2 [shape = 'f32[18,18,4]{2,1,0:T(8,128)}', space=vmem, size = 0x36000, scoped, tag = 'scratch operand']
  %s0 = inlined_call_operand.vmem [shape: f32[2,16,16,4], index: 0, kind: input, shape index: {}]
  %s1 = inlined_call_operand.vmem [shape: f32[2,16,16,4], index: 1, kind: input, shape index: {}]
  %s2 = inlined_call_operand.vmem [shape: f32[2,16,16,4], index: 2, kind: input, shape index: {}]
  %s3 = inlined_call_operand.vmem [shape: bf16[36,128], index: 3, kind: input, shape index: {}]
  %s4 = inlined_call_operand.hbm [shape: f32[2,16,16,128], index: 4, kind: output, shape index: {}]
  %s5 = sld [smem:[#allocation0]]
  $region49: #{tpu_custom_call.1} parent=0
    _
  %s7 = ssub.s32 1, %s5
  %s8 = scalar_select 0, %s7, %s5
  $region1: #{tpu_custom_call.1} parent=0
    #allocation3 [shape = 'u8[262144]{0}', space=vmem, size = 0x40000, scoped, tag = 'output window, operand 0']
    #allocation4 [shape = 's32[2]{0}', space=sflag, size = 0x8, scoped, tag = 'scoped memory for tpu_custom_call.1']
    %9 = vsyncpa [#allocation4], 0
    %s10 = scalar_lea.sflag [#allocation4], 1
    %11 = vsyncpa %s10, 0
    loop: start=0, step=1, limit=4
    $region2: #{tpu_custom_call.1} parent=1 // loop_pre_header
      _
    $region3: #{tpu_custom_call.1} parent=1 // loop_header
      %s13 = sphi 0, %s17
      %p14 = scmp.ge.s32.totalorder %s13, 4
      %s23 = sphi 0, %s25
      %s26 = sphi 0, %s23
      %s27 = sphi 0, %s26
      %s43 = sphi 0, %s27
      %s49 = sphi 0, %s51
      %s52 = sphi 0, %s49
      %s53 = sphi 0, %s52
      %s69 = sphi 0, %s53
      %s75 = sphi 0, %s77
      %s78 = sphi 0, %s75
      %s79 = sphi 0, %s78
      %s95 = sphi 0, %s79
      %s99 = sphi 0, %s99
      %s101 = sphi 0, %s99
      %s102 = sphi 0, %s101
      %s116 = sphi 0, %s102
      %s122 = sphi 0, %s124
      %s125 = sphi 0, %s122
      %s126 = sphi 0, %s125
      %s142 = sphi 0, %s126
    $region4: #{tpu_custom_call.1} parent=1 // loop_header_branch
      %16 = sbr.rel (%p14) target = $region8
    $region5: #{tpu_custom_call.1} parent=1 // loop_body
      %s18 = ssub.s32 %s13, 1
      %s19 = ssub.s32 %s13, 2
      %s20 = sadd.s32 %s13, 1
      %s21 = ssub.s32 %s13, %s20
      %p22 = scmp.eq.s32.totalorder %s21, 0
      %s24 = sadd.s32 %s23, 1
      %s25 = scalar_select %p22, %s23, %s24
      %p28 = pneg %p22
      %p29 = scmp.eq.s32.totalorder %s13, 1
      %p30 = por %p28, %p29
      %p31 = scmp.ne.s32.totalorder %s23, %s26
      %p32 = scmp.eq.s32.totalorder %s13, 0
      %p33 = por %p31, %p32
      %p34 = scmp.ne.s32.totalorder %s23, %s26
      %p35 = scmp.eq.s32.totalorder %s18, 1
      %p36 = por %p34, %p35
      %p37 = scmp.ne.s32.totalorder %s26, %s27
      %p38 = scmp.eq.s32.totalorder %s18, 0
      %p39 = por %p37, %p38
      %p40 = scmp.ne.s32.totalorder %s26, %s27
      %p41 = scmp.eq.s32.totalorder %s19, 1
      %p42 = por %p40, %p41
      %p44 = scmp.ne.s32.totalorder %s27, %s43
      %p45 = scmp.eq.s32.totalorder %s19, 0
      %p46 = por %p44, %p45
      %s47 = ssub.s32 %s13, %s20
      %p48 = scmp.eq.s32.totalorder %s47, 0
      %s50 = sadd.s32 %s49, 1
      %s51 = scalar_select %p48, %s49, %s50
      %p54 = pneg %p48
      %p55 = scmp.eq.s32.totalorder %s13, 1
      %p56 = por %p54, %p55
      %p57 = scmp.ne.s32.totalorder %s49, %s52
      %p58 = scmp.eq.s32.totalorder %s13, 0
      %p59 = por %p57, %p58
      %p60 = scmp.ne.s32.totalorder %s49, %s52
      %p61 = scmp.eq.s32.totalorder %s18, 1
      %p62 = por %p60, %p61
      %p63 = scmp.ne.s32.totalorder %s52, %s53
      %p64 = scmp.eq.s32.totalorder %s18, 0
      %p65 = por %p63, %p64
      %p66 = scmp.ne.s32.totalorder %s52, %s53
      %p67 = scmp.eq.s32.totalorder %s19, 1
      %p68 = por %p66, %p67
      %p70 = scmp.ne.s32.totalorder %s53, %s69
      %p71 = scmp.eq.s32.totalorder %s19, 0
      %p72 = por %p70, %p71
      %s73 = ssub.s32 %s13, %s20
      %p74 = scmp.eq.s32.totalorder %s73, 0
      %s76 = sadd.s32 %s75, 1
      %s77 = scalar_select %p74, %s75, %s76
      %p80 = pneg %p74
      %p81 = scmp.eq.s32.totalorder %s13, 1
      %p82 = por %p80, %p81
      %p83 = scmp.ne.s32.totalorder %s75, %s78
      %p84 = scmp.eq.s32.totalorder %s13, 0
      %p85 = por %p83, %p84
      %p86 = scmp.ne.s32.totalorder %s75, %s78
      %p87 = scmp.eq.s32.totalorder %s18, 1
      %p88 = por %p86, %p87
      %p89 = scmp.ne.s32.totalorder %s78, %s79
      %p90 = scmp.eq.s32.totalorder %s18, 0
      %p91 = por %p89, %p90
      %p92 = scmp.ne.s32.totalorder %s78, %s79
      %p93 = scmp.eq.s32.totalorder %s19, 1
      %p94 = por %p92, %p93
      %p96 = scmp.ne.s32.totalorder %s79, %s95
      %p97 = scmp.eq.s32.totalorder %s19, 0
      %p98 = por %p96, %p97
      %s100 = sadd.s32 %s99, 1
      %p103 = scmp.eq.s32.totalorder %s13, 1
      %p104 = scmp.ne.s32.totalorder %s99, %s101
      %p105 = scmp.eq.s32.totalorder %s13, 0
      %p106 = por %p104, %p105
      %p107 = scmp.ne.s32.totalorder %s99, %s101
      %p108 = scmp.eq.s32.totalorder %s18, 1
      %p109 = por %p107, %p108
      %p110 = scmp.ne.s32.totalorder %s101, %s102
      %p111 = scmp.eq.s32.totalorder %s18, 0
      %p112 = por %p110, %p111
      %p113 = scmp.ne.s32.totalorder %s101, %s102
      %p114 = scmp.eq.s32.totalorder %s19, 1
      %p115 = por %p113, %p114
      %p117 = scmp.ne.s32.totalorder %s102, %s116
      %p118 = scmp.eq.s32.totalorder %s19, 0
      %p119 = por %p117, %p118
      %s120 = ssub.s32 %s13, %s20
      %p121 = scmp.eq.s32.totalorder %s120, 0
      %s123 = sadd.s32 %s122, 1
      %s124 = scalar_select %p121, %s122, %s123
      %p127 = pneg %p121
      %p128 = scmp.eq.s32.totalorder %s13, 1
      %p129 = por %p127, %p128
      %p130 = scmp.ne.s32.totalorder %s122, %s125
      %p131 = scmp.eq.s32.totalorder %s13, 0
      %p132 = por %p130, %p131
      %p133 = scmp.ne.s32.totalorder %s122, %s125
      %p134 = scmp.eq.s32.totalorder %s18, 1
      %p135 = por %p133, %p134
      %p136 = scmp.ne.s32.totalorder %s125, %s126
      %p137 = scmp.eq.s32.totalorder %s18, 0
      %p138 = por %p136, %p137
      %p139 = scmp.ne.s32.totalorder %s125, %s126
      %p140 = scmp.eq.s32.totalorder %s19, 1
      %p141 = por %p139, %p140
      %p143 = scmp.ne.s32.totalorder %s126, %s142
      %p144 = scmp.eq.s32.totalorder %s19, 0
      %p145 = por %p143, %p144
      %p146 = scmp.le.s32.totalorder 1, %s13
      %p147 = scmp.lt.s32.totalorder %s13, 3
      %p148 = pnand %p146, %p147
      %p149 = pneg %p148
      // Predicated region
      $region9: #{tpu_custom_call.1} parent=5 // pred_check
        _
      $region10: #{tpu_custom_call.1} parent=5 // pred_check_branch
        %151 = sbr.rel (%p148) target = $region12
      $region11: #{tpu_custom_call.1} parent=5 // pred_region
        %s152 = ssub.s32 %s13, 1
        // Predicated region
        $region13: #{tpu_custom_call.1} parent=11 // pred_check
          %p153 = pneg %p112
        $region14: #{tpu_custom_call.1} parent=11 // pred_check_branch
          %155 = sbr.rel (%p153) target = $region16
        $region15: #{tpu_custom_call.1} parent=11 // pred_region
          _
        $region16: #{tpu_custom_call.1} parent=11 // pred_fallthru
          _
      $region12: #{tpu_custom_call.1} parent=5 // pred_fallthru
        _
      %p156 = scmp.lt.s32.totalorder %s13, 2
      // Predicated region
      $region17: #{tpu_custom_call.1} parent=5 // pred_check
        %p157 = pneg %p156
      $region18: #{tpu_custom_call.1} parent=5 // pred_check_branch
        %159 = sbr.rel (%p157) target = $region20
      $region19: #{tpu_custom_call.1} parent=5 // pred_region
        // Predicated region
        $region21: #{tpu_custom_call.1} parent=19 // pred_check
          %p160 = pneg %p33
        $region22: #{tpu_custom_call.1} parent=19 // pred_check_branch
          %162 = sbr.rel (%p160) target = $region24
        $region23: #{tpu_custom_call.1} parent=19 // pred_region
          %p163 = scmp.lt.s32.totalorder %s13, 1
          %s164 = scalar_select %p163, %s13, 1
          %s165 = smul.addr %s164, 32
          %s166 = smul.addr %s165, 8
          %s167 = scalar_lea.vmem %s0, %s166
        $region24: #{tpu_custom_call.1} parent=19 // pred_fallthru
          _
        // Predicated region
        $region25: #{tpu_custom_call.1} parent=19 // pred_check
          %p168 = pneg %p59
        $region26: #{tpu_custom_call.1} parent=19 // pred_check_branch
          %170 = sbr.rel (%p168) target = $region28
        $region27: #{tpu_custom_call.1} parent=19 // pred_region
          %p171 = scmp.lt.s32.totalorder %s13, 1
          %s172 = scalar_select %p171, %s13, 1
          %s173 = smul.addr %s172, 32
          %s174 = smul.addr %s173, 8
          %s175 = scalar_lea.vmem %s1, %s174
        $region28: #{tpu_custom_call.1} parent=19 // pred_fallthru
          _
        // Predicated region
        $region29: #{tpu_custom_call.1} parent=19 // pred_check
          %p176 = pneg %p85
        $region30: #{tpu_custom_call.1} parent=19 // pred_check_branch
          %178 = sbr.rel (%p176) target = $region32
        $region31: #{tpu_custom_call.1} parent=19 // pred_region
          %p179 = scmp.lt.s32.totalorder %s13, 1
          %s180 = scalar_select %p179, %s13, 1
          %s181 = smul.addr %s180, 32
          %s182 = smul.addr %s181, 8
          %s183 = scalar_lea.vmem %s2, %s182
        $region32: #{tpu_custom_call.1} parent=19 // pred_fallthru
          _
      $region20: #{tpu_custom_call.1} parent=5 // pred_fallthru
        _
      %p184 = scmp.le.s32.totalorder 1, %s13
      %p185 = scmp.lt.s32.totalorder %s13, 3
      %p186 = pnand %p184, %p185
      %p187 = pneg %p186
      // Predicated region
      $region33: #{tpu_custom_call.1} parent=5 // pred_check
        _
      $region34: #{tpu_custom_call.1} parent=5 // pred_check_branch
        %189 = sbr.rel (%p186) target = $region36
      $region35: #{tpu_custom_call.1} parent=5 // pred_region
        %s190 = ssub.s32 %s13, 1
        %p191 = scmp.lt.s32.totalorder %s18, 1
        %s192 = scalar_select %p191, %s18, 1
        %s193 = smul.addr %s192, 32
        %s194 = smul.addr %s193, 8
        %s195 = scalar_lea.vmem %s0, %s194
        %p196 = pneg %p39
        %p197 = pneg %p36
        %p198 = scmp.lt.s32.totalorder %s18, 1
        %s199 = scalar_select %p198, %s18, 1
        %s200 = smul.addr %s199, 32
        %s201 = smul.addr %s200, 8
        %s202 = scalar_lea.vmem %s1, %s201
        %p203 = pneg %p65
        %p204 = pneg %p62
        %p205 = scmp.lt.s32.totalorder %s18, 1
        %s206 = scalar_select %p205, %s18, 1
        %s207 = smul.addr %s206, 32
        %s208 = smul.addr %s207, 8
        %s209 = scalar_lea.vmem %s2, %s208
        %p210 = pneg %p91
        %p211 = pneg %p88
        %p212 = pneg %p112
        %p213 = pneg %p109
        %p214 = pneg %p138
        %p215 = pneg %p135
        %s216 = sand.u32 %s125, 1
        %s217 = scalar_lea.sflag [#allocation4], %s216
        %s218 = sand.u32 %s125, 1
        %s219 = smul.addr %s218, 256
        %s220 = scalar_lea.vmem [#allocation3], %s219
        %p221 = scmp.lt.s32.totalorder %s18, 1
        %s222 = scalar_select %p221, %s18, 1
        %s223 = smul.addr %s222, 32
        %s224 = smul.addr %s223, 8
        %s225 = scalar_lea.vmem %s0, %s224
        %p226 = scmp.lt.s32.totalorder %s18, 1
        %s227 = scalar_select %p226, %s18, 1
        %s228 = smul.addr %s227, 32
        %s229 = smul.addr %s228, 8
        %s230 = scalar_lea.vmem %s1, %s229
        %p231 = scmp.lt.s32.totalorder %s18, 1
        %s232 = scalar_select %p231, %s18, 1
        %s233 = smul.addr %s232, 32
        %s234 = smul.addr %s233, 8
        %s235 = scalar_lea.vmem %s2, %s234
        %v237 = vld [vmem:[%s225] sm:$0xff]
        %v238 = vld [vmem:[%s225 + $0x8] sm:$0xff]
        %v239 = vld [vmem:[%s225 + $0x10] sm:$0xff]
        %v240 = vld [vmem:[%s225 + $0x18] sm:$0xff]
        %v241 = vld [vmem:[%s225 + $0x20] sm:$0xff]
        %v242 = vld [vmem:[%s225 + $0x28] sm:$0xff]
        %v243 = vld [vmem:[%s225 + $0x30] sm:$0xff]
        %v244 = vld [vmem:[%s225 + $0x38] sm:$0xff]
        %v245 = vld [vmem:[%s225 + $0x40] sm:$0xff]
        %v246 = vld [vmem:[%s225 + $0x48] sm:$0xff]
        %v247 = vld [vmem:[%s225 + $0x50] sm:$0xff]
        %v248 = vld [vmem:[%s225 + $0x58] sm:$0xff]
        %v249 = vld [vmem:[%s225 + $0x60] sm:$0xff]
        %v250 = vld [vmem:[%s225 + $0x68] sm:$0xff]
        %v251 = vld [vmem:[%s225 + $0x70] sm:$0xff]
        %v252 = vld [vmem:[%s225 + $0x78] sm:$0xff]
        %v253 = vld [vmem:[%s225 + $0x80] sm:$0xff]
        %v254 = vld [vmem:[%s225 + $0x88] sm:$0xff]
        %v255 = vld [vmem:[%s225 + $0x90] sm:$0xff]
        %v256 = vld [vmem:[%s225 + $0x98] sm:$0xff]
        %v257 = vld [vmem:[%s225 + $0xa0] sm:$0xff]
        %v258 = vld [vmem:[%s225 + $0xa8] sm:$0xff]
        %v259 = vld [vmem:[%s225 + $0xb0] sm:$0xff]
        %v260 = vld [vmem:[%s225 + $0xb8] sm:$0xff]
        %v261 = vld [vmem:[%s225 + $0xc0] sm:$0xff]
        %v262 = vld [vmem:[%s225 + $0xc8] sm:$0xff]
        %v263 = vld [vmem:[%s225 + $0xd0] sm:$0xff]
        %v264 = vld [vmem:[%s225 + $0xd8] sm:$0xff]
        %v265 = vld [vmem:[%s225 + $0xe0] sm:$0xff]
        %v266 = vld [vmem:[%s225 + $0xe8] sm:$0xff]
        %v267 = vld [vmem:[%s225 + $0xf0] sm:$0xff]
        %v268 = vld [vmem:[%s225 + $0xf8] sm:$0xff]
        %v269 = vld [vmem:[%s230] sm:$0xff]
        %v270 = vld [vmem:[%s230 + $0x8] sm:$0xff]
        %v271 = vld [vmem:[%s230 + $0x10] sm:$0xff]
        %v272 = vld [vmem:[%s230 + $0x18] sm:$0xff]
        %v273 = vld [vmem:[%s230 + $0x20] sm:$0xff]
        %v274 = vld [vmem:[%s230 + $0x28] sm:$0xff]
        %v275 = vld [vmem:[%s230 + $0x30] sm:$0xff]
        %v276 = vld [vmem:[%s230 + $0x38] sm:$0xff]
        %v277 = vld [vmem:[%s230 + $0x40] sm:$0xff]
        %v278 = vld [vmem:[%s230 + $0x48] sm:$0xff]
        %v279 = vld [vmem:[%s230 + $0x50] sm:$0xff]
        %v280 = vld [vmem:[%s230 + $0x58] sm:$0xff]
        %v281 = vld [vmem:[%s230 + $0x60] sm:$0xff]
        %v282 = vld [vmem:[%s230 + $0x68] sm:$0xff]
        %v283 = vld [vmem:[%s230 + $0x70] sm:$0xff]
        %v284 = vld [vmem:[%s230 + $0x78] sm:$0xff]
        %v285 = vld [vmem:[%s230 + $0x80] sm:$0xff]
        %v286 = vld [vmem:[%s230 + $0x88] sm:$0xff]
        %v287 = vld [vmem:[%s230 + $0x90] sm:$0xff]
        %v288 = vld [vmem:[%s230 + $0x98] sm:$0xff]
        %v289 = vld [vmem:[%s230 + $0xa0] sm:$0xff]
        %v290 = vld [vmem:[%s230 + $0xa8] sm:$0xff]
        %v291 = vld [vmem:[%s230 + $0xb0] sm:$0xff]
        %v292 = vld [vmem:[%s230 + $0xb8] sm:$0xff]
        %v293 = vld [vmem:[%s230 + $0xc0] sm:$0xff]
        %v294 = vld [vmem:[%s230 + $0xc8] sm:$0xff]
        %v295 = vld [vmem:[%s230 + $0xd0] sm:$0xff]
        %v296 = vld [vmem:[%s230 + $0xd8] sm:$0xff]
        %v297 = vld [vmem:[%s230 + $0xe0] sm:$0xff]
        %v298 = vld [vmem:[%s230 + $0xe8] sm:$0xff]
        %v299 = vld [vmem:[%s230 + $0xf0] sm:$0xff]
        %v300 = vld [vmem:[%s230 + $0xf8] sm:$0xff]
        %v301 = vmul.f32 %v237, %v269
        %v302 = vmul.f32 %v238, %v270
        %v303 = vmul.f32 %v239, %v271
        %v304 = vmul.f32 %v240, %v272
        %v305 = vmul.f32 %v241, %v273
        %v306 = vmul.f32 %v242, %v274
        %v307 = vmul.f32 %v243, %v275
        %v308 = vmul.f32 %v244, %v276
        %v309 = vmul.f32 %v245, %v277
        %v310 = vmul.f32 %v246, %v278
        %v311 = vmul.f32 %v247, %v279
        %v312 = vmul.f32 %v248, %v280
        %v313 = vmul.f32 %v249, %v281
        %v314 = vmul.f32 %v250, %v282
        %v315 = vmul.f32 %v251, %v283
        %v316 = vmul.f32 %v252, %v284
        %v317 = vmul.f32 %v253, %v285
        %v318 = vmul.f32 %v254, %v286
        %v319 = vmul.f32 %v255, %v287
        %v320 = vmul.f32 %v256, %v288
        %v321 = vmul.f32 %v257, %v289
        %v322 = vmul.f32 %v258, %v290
        %v323 = vmul.f32 %v259, %v291
        %v324 = vmul.f32 %v260, %v292
        %v325 = vmul.f32 %v261, %v293
        %v326 = vmul.f32 %v262, %v294
        %v327 = vmul.f32 %v263, %v295
        %v328 = vmul.f32 %v264, %v296
        %v329 = vmul.f32 %v265, %v297
        %v330 = vmul.f32 %v266, %v298
        %v331 = vmul.f32 %v267, %v299
        %v332 = vmul.f32 %v268, %v300
        %v333 = vld [vmem:[%s235] sm:$0xff]
        %v334 = vld [vmem:[%s235 + $0x8] sm:$0xff]
        %v335 = vld [vmem:[%s235 + $0x10] sm:$0xff]
        %v336 = vld [vmem:[%s235 + $0x18] sm:$0xff]
        %v337 = vld [vmem:[%s235 + $0x20] sm:$0xff]
        %v338 = vld [vmem:[%s235 + $0x28] sm:$0xff]
        %v339 = vld [vmem:[%s235 + $0x30] sm:$0xff]
        %v340 = vld [vmem:[%s235 + $0x38] sm:$0xff]
        %v341 = vld [vmem:[%s235 + $0x40] sm:$0xff]
        %v342 = vld [vmem:[%s235 + $0x48] sm:$0xff]
        %v343 = vld [vmem:[%s235 + $0x50] sm:$0xff]
        %v344 = vld [vmem:[%s235 + $0x58] sm:$0xff]
        %v345 = vld [vmem:[%s235 + $0x60] sm:$0xff]
        %v346 = vld [vmem:[%s235 + $0x68] sm:$0xff]
        %v347 = vld [vmem:[%s235 + $0x70] sm:$0xff]
        %v348 = vld [vmem:[%s235 + $0x78] sm:$0xff]
        %v349 = vld [vmem:[%s235 + $0x80] sm:$0xff]
        %v350 = vld [vmem:[%s235 + $0x88] sm:$0xff]
        %v351 = vld [vmem:[%s235 + $0x90] sm:$0xff]
        %v352 = vld [vmem:[%s235 + $0x98] sm:$0xff]
        %v353 = vld [vmem:[%s235 + $0xa0] sm:$0xff]
        %v354 = vld [vmem:[%s235 + $0xa8] sm:$0xff]
        %v355 = vld [vmem:[%s235 + $0xb0] sm:$0xff]
        %v356 = vld [vmem:[%s235 + $0xb8] sm:$0xff]
        %v357 = vld [vmem:[%s235 + $0xc0] sm:$0xff]
        %v358 = vld [vmem:[%s235 + $0xc8] sm:$0xff]
        %v359 = vld [vmem:[%s235 + $0xd0] sm:$0xff]
        %v360 = vld [vmem:[%s235 + $0xd8] sm:$0xff]
        %v361 = vld [vmem:[%s235 + $0xe0] sm:$0xff]
        %v362 = vld [vmem:[%s235 + $0xe8] sm:$0xff]
        %v363 = vld [vmem:[%s235 + $0xf0] sm:$0xff]
        %v364 = vld [vmem:[%s235 + $0xf8] sm:$0xff]
        %v365 = vmul.f32 %v301, %v333
        %v366 = vmul.f32 %v302, %v334
        %v367 = vmul.f32 %v303, %v335
        %v368 = vmul.f32 %v304, %v336
        %v369 = vmul.f32 %v305, %v337
        %v370 = vmul.f32 %v306, %v338
        %v371 = vmul.f32 %v307, %v339
        %v372 = vmul.f32 %v308, %v340
        %v373 = vmul.f32 %v309, %v341
        %v374 = vmul.f32 %v310, %v342
        %v375 = vmul.f32 %v311, %v343
        %v376 = vmul.f32 %v312, %v344
        %v377 = vmul.f32 %v313, %v345
        %v378 = vmul.f32 %v314, %v346
        %v379 = vmul.f32 %v315, %v347
        %v380 = vmul.f32 %v316, %v348
        %v381 = vmul.f32 %v317, %v349
        %v382 = vmul.f32 %v318, %v350
        %v383 = vmul.f32 %v319, %v351
        %v384 = vmul.f32 %v320, %v352
        %v385 = vmul.f32 %v321, %v353
        %v386 = vmul.f32 %v322, %v354
        %v387 = vmul.f32 %v323, %v355
        %v388 = vmul.f32 %v324, %v356
        %v389 = vmul.f32 %v325, %v357
        %v390 = vmul.f32 %v326, %v358
        %v391 = vmul.f32 %v327, %v359
        %v392 = vmul.f32 %v328, %v360
        %v393 = vmul.f32 %v329, %v361
        %v394 = vmul.f32 %v330, %v362
        %v395 = vmul.f32 %v331, %v363
        %v396 = vmul.f32 %v332, %v364
        %vm397 = vcmask 31744
        %398 = vst.msk [vmem:[#allocation2] sm:$0xff] %vm397, 0.0
        %399 = vst.msk [vmem:[#allocation2 + $0x8] sm:$0xff] %vm397, 0.0
        %vm400 = vcmask 25600
        %401 = vst.msk [vmem:[#allocation2 + $0x10] sm:$0x3] %vm400, 0.0
        %s402 = scalar_lea.vmem [#allocation2], 408
        %403 = vst.msk [vmem:[%s402] sm:$0xff] %vm397, 0.0
        %404 = vst.msk [vmem:[%s402 + $0x8] sm:$0xff] %vm397, 0.0
        %405 = vst.msk [vmem:[%s402 + $0x10] sm:$0x3] %vm400, 0.0
        %s406 = scalar_lea.vmem [#allocation2], 24
        %vm407 = vcmask 24576
        %408 = vst.msk [vmem:[%s406] sm:$0x1] %vm407, 0.0
        %409 = vst.msk [vmem:[%s406 + $0x18] sm:$0x1] %vm407, 0.0
        %410 = vst.msk [vmem:[%s406 + $0x30] sm:$0x1] %vm407, 0.0
        %411 = vst.msk [vmem:[%s406 + $0x48] sm:$0x1] %vm407, 0.0
        %412 = vst.msk [vmem:[%s406 + $0x60] sm:$0x1] %vm407, 0.0
        %413 = vst.msk [vmem:[%s406 + $0x78] sm:$0x1] %vm407, 0.0
        %414 = vst.msk [vmem:[%s406 + $0x90] sm:$0x1] %vm407, 0.0
        %415 = vst.msk [vmem:[%s406 + $0xa8] sm:$0x1] %vm407, 0.0
        %416 = vst.msk [vmem:[%s406 + $0xc0] sm:$0x1] %vm407, 0.0
        %417 = vst.msk [vmem:[%s406 + $0xd8] sm:$0x1] %vm407, 0.0
        %418 = vst.msk [vmem:[%s406 + $0xf0] sm:$0x1] %vm407, 0.0
        %419 = vst.msk [vmem:[%s406 + $0x108] sm:$0x1] %vm407, 0.0
        %420 = vst.msk [vmem:[%s406 + $0x120] sm:$0x1] %vm407, 0.0
        %421 = vst.msk [vmem:[%s406 + $0x138] sm:$0x1] %vm407, 0.0
        %422 = vst.msk [vmem:[%s406 + $0x150] sm:$0x1] %vm407, 0.0
        %423 = vst.msk [vmem:[%s406 + $0x168] sm:$0x1] %vm407, 0.0
        %424 = vst.msk [vmem:[%s406 + $0x11] sm:$0x1] %vm407, 0.0
        %425 = vst.msk [vmem:[%s406 + $0x29] sm:$0x1] %vm407, 0.0
        %426 = vst.msk [vmem:[%s406 + $0x41] sm:$0x1] %vm407, 0.0
        %427 = vst.msk [vmem:[%s406 + $0x59] sm:$0x1] %vm407, 0.0
        %428 = vst.msk [vmem:[%s406 + $0x71] sm:$0x1] %vm407, 0.0
        %429 = vst.msk [vmem:[%s406 + $0x89] sm:$0x1] %vm407, 0.0
        %430 = vst.msk [vmem:[%s406 + $0xa1] sm:$0x1] %vm407, 0.0
        %431 = vst.msk [vmem:[%s406 + $0xb9] sm:$0x1] %vm407, 0.0
        %432 = vst.msk [vmem:[%s406 + $0xd1] sm:$0x1] %vm407, 0.0
        %433 = vst.msk [vmem:[%s406 + $0xe9] sm:$0x1] %vm407, 0.0
        %434 = vst.msk [vmem:[%s406 + $0x101] sm:$0x1] %vm407, 0.0
        %435 = vst.msk [vmem:[%s406 + $0x119] sm:$0x1] %vm407, 0.0
        %436 = vst.msk [vmem:[%s406 + $0x131] sm:$0x1] %vm407, 0.0
        %437 = vst.msk [vmem:[%s406 + $0x149] sm:$0x1] %vm407, 0.0
        %438 = vst.msk [vmem:[%s406 + $0x161] sm:$0x1] %vm407, 0.0
        %439 = vst.msk [vmem:[%s406 + $0x179] sm:$0x1] %vm407, 0.0
        %440 = vst.msk [vmem:[%s406 + $0x1] sm:$0xff] %vm397, %v365
        %441 = vst.msk [vmem:[%s406 + $0x9] sm:$0xff] %vm397, %v366
        %442 = vst.msk [vmem:[%s406 + $0x19] sm:$0xff] %vm397, %v367
        %443 = vst.msk [vmem:[%s406 + $0x21] sm:$0xff] %vm397, %v368
        %444 = vst.msk [vmem:[%s406 + $0x31] sm:$0xff] %vm397, %v369
        %445 = vst.msk [vmem:[%s406 + $0x39] sm:$0xff] %vm397, %v370
        %446 = vst.msk [vmem:[%s406 + $0x49] sm:$0xff] %vm397, %v371
        %447 = vst.msk [vmem:[%s406 + $0x51] sm:$0xff] %vm397, %v372
        %448 = vst.msk [vmem:[%s406 + $0x61] sm:$0xff] %vm397, %v373
        %449 = vst.msk [vmem:[%s406 + $0x69] sm:$0xff] %vm397, %v374
        %450 = vst.msk [vmem:[%s406 + $0x79] sm:$0xff] %vm397, %v375
        %451 = vst.msk [vmem:[%s406 + $0x81] sm:$0xff] %vm397, %v376
        %452 = vst.msk [vmem:[%s406 + $0x91] sm:$0xff] %vm397, %v377
        %453 = vst.msk [vmem:[%s406 + $0x99] sm:$0xff] %vm397, %v378
        %454 = vst.msk [vmem:[%s406 + $0xa9] sm:$0xff] %vm397, %v379
        %455 = vst.msk [vmem:[%s406 + $0xb1] sm:$0xff] %vm397, %v380
        %456 = vst.msk [vmem:[%s406 + $0xc1] sm:$0xff] %vm397, %v381
        %457 = vst.msk [vmem:[%s406 + $0xc9] sm:$0xff] %vm397, %v382
        %458 = vst.msk [vmem:[%s406 + $0xd9] sm:$0xff] %vm397, %v383
        %459 = vst.msk [vmem:[%s406 + $0xe1] sm:$0xff] %vm397, %v384
        %460 = vst.msk [vmem:[%s406 + $0xf1] sm:$0xff] %vm397, %v385
        %461 = vst.msk [vmem:[%s406 + $0xf9] sm:$0xff] %vm397, %v386
        %462 = vst.msk [vmem:[%s406 + $0x109] sm:$0xff] %vm397, %v387
        %463 = vst.msk [vmem:[%s406 + $0x111] sm:$0xff] %vm397, %v388
        %464 = vst.msk [vmem:[%s406 + $0x121] sm:$0xff] %vm397, %v389
        %465 = vst.msk [vmem:[%s406 + $0x129] sm:$0xff] %vm397, %v390
        %466 = vst.msk [vmem:[%s406 + $0x139] sm:$0xff] %vm397, %v391
        %467 = vst.msk [vmem:[%s406 + $0x141] sm:$0xff] %vm397, %v392
        %468 = vst.msk [vmem:[%s406 + $0x151] sm:$0xff] %vm397, %v393
        %469 = vst.msk [vmem:[%s406 + $0x159] sm:$0xff] %vm397, %v394
        %470 = vst.msk [vmem:[%s406 + $0x169] sm:$0xff] %vm397, %v395
        %471 = vst.msk [vmem:[%s406 + $0x171] sm:$0xff] %vm397, %v396
        %v472 = vld [vmem:[#allocation2] sm:$0xff]
        %v473 = vld [vmem:[#allocation2 + $0x8] sm:$0xff]
        %v474 = vld [vmem:[#allocation2 + $0x18] sm:$0xff]
        %v475 = vld [vmem:[#allocation2 + $0x20] sm:$0xff]
        %v476 = vld [vmem:[#allocation2 + $0x30] sm:$0xff]
        %v477 = vld [vmem:[#allocation2 + $0x38] sm:$0xff]
        %v478 = vld [vmem:[#allocation2 + $0x48] sm:$0xff]
        %v479 = vld [vmem:[#allocation2 + $0x50] sm:$0xff]
        %v480 = vld [vmem:[#allocation2 + $0x60] sm:$0xff]
        %v481 = vld [vmem:[#allocation2 + $0x68] sm:$0xff]
        %v482 = vld [vmem:[#allocation2 + $0x78] sm:$0xff]
        %v483 = vld [vmem:[#allocation2 + $0x80] sm:$0xff]
        %v484 = vld [vmem:[#allocation2 + $0x90] sm:$0xff]
        %v485 = vld [vmem:[#allocation2 + $0x98] sm:$0xff]
        %v486 = vld [vmem:[#allocation2 + $0xa8] sm:$0xff]
        %v487 = vld [vmem:[#allocation2 + $0xb0] sm:$0xff]
        %v488 = vld [vmem:[#allocation2 + $0xc0] sm:$0xff]
        %v489 = vld [vmem:[#allocation2 + $0xc8] sm:$0xff]
        %v490 = vld [vmem:[#allocation2 + $0xd8] sm:$0xff]
        %v491 = vld [vmem:[#allocation2 + $0xe0] sm:$0xff]
        %v492 = vld [vmem:[#allocation2 + $0xf0] sm:$0xff]
        %v493 = vld [vmem:[#allocation2 + $0xf8] sm:$0xff]
        %v494 = vld [vmem:[#allocation2 + $0x108] sm:$0xff]
        %v495 = vld [vmem:[#allocation2 + $0x110] sm:$0xff]
        %v496 = vld [vmem:[#allocation2 + $0x120] sm:$0xff]
        %v497 = vld [vmem:[#allocation2 + $0x128] sm:$0xff]
        %v498 = vld [vmem:[#allocation2 + $0x138] sm:$0xff]
        %v499 = vld [vmem:[#allocation2 + $0x140] sm:$0xff]
        %v500 = vld [vmem:[#allocation2 + $0x150] sm:$0xff]
        %v501 = vld [vmem:[#allocation2 + $0x158] sm:$0xff]
        %v502 = vld [vmem:[#allocation2 + $0x168] sm:$0xff]
        %v503 = vld [vmem:[#allocation2 + $0x170] sm:$0xff]
        %v504 = vld [vmem:[#allocation2 + $0x180] sm:$0xff]
        %v505 = vld [vmem:[#allocation2 + $0x188] sm:$0xff]
        %v506 = vld [vmem:[#allocation2 + $0x198] sm:$0xff]
        %v507 = vld [vmem:[#allocation2 + $0x1a0] sm:$0xff]
        %v508 = vld [vmem:[#allocation2 + $0x1] sm:$0xff]
        %v509 = vld [vmem:[#allocation2 + $0x9] sm:$0xff]
        %v510 = vld [vmem:[#allocation2 + $0x19] sm:$0xff]
        %v511 = vld [vmem:[#allocation2 + $0x21] sm:$0xff]
        %v512 = vld [vmem:[#allocation2 + $0x31] sm:$0xff]
        %v513 = vld [vmem:[#allocation2 + $0x39] sm:$0xff]
        %v514 = vld [vmem:[#allocation2 + $0x49] sm:$0xff]
        %v515 = vld [vmem:[#allocation2 + $0x51] sm:$0xff]
        %v516 = vld [vmem:[#allocation2 + $0x61] sm:$0xff]
        %v517 = vld [vmem:[#allocation2 + $0x69] sm:$0xff]
        %v518 = vld [vmem:[#allocation2 + $0x79] sm:$0xff]
        %v519 = vld [vmem:[#allocation2 + $0x81] sm:$0xff]
        %v520 = vld [vmem:[#allocation2 + $0x91] sm:$0xff]
        %v521 = vld [vmem:[#allocation2 + $0x99] sm:$0xff]
        %v522 = vld [vmem:[#allocation2 + $0xa9] sm:$0xff]
        %v523 = vld [vmem:[#allocation2 + $0xb1] sm:$0xff]
        %v524 = vld [vmem:[#allocation2 + $0xc1] sm:$0xff]
        %v525 = vld [vmem:[#allocation2 + $0xc9] sm:$0xff]
        %v526 = vld [vmem:[#allocation2 + $0xd9] sm:$0xff]
        %v527 = vld [vmem:[#allocation2 + $0xe1] sm:$0xff]
        %v528 = vld [vmem:[#allocation2 + $0xf1] sm:$0xff]
        %v529 = vld [vmem:[#allocation2 + $0xf9] sm:$0xff]
        %v530 = vld [vmem:[#allocation2 + $0x109] sm:$0xff]
        %v531 = vld [vmem:[#allocation2 + $0x111] sm:$0xff]
        %v532 = vld [vmem:[#allocation2 + $0x121] sm:$0xff]
        %v533 = vld [vmem:[#allocation2 + $0x129] sm:$0xff]
        %v534 = vld [vmem:[#allocation2 + $0x139] sm:$0xff]
        %v535 = vld [vmem:[#allocation2 + $0x141] sm:$0xff]
        %v536 = vld [vmem:[#allocation2 + $0x151] sm:$0xff]
        %v537 = vld [vmem:[#allocation2 + $0x159] sm:$0xff]
        %v538 = vld [vmem:[#allocation2 + $0x169] sm:$0xff]
        %v539 = vld [vmem:[#allocation2 + $0x171] sm:$0xff]
        %v540 = vld [vmem:[#allocation2 + $0x181] sm:$0xff]
        %v541 = vld [vmem:[#allocation2 + $0x189] sm:$0xff]
        %v542 = vld [vmem:[#allocation2 + $0x199] sm:$0xff]
        %v543 = vld [vmem:[#allocation2 + $0x1a1] sm:$0xff]
        %v544 = vld [vmem:[#allocation2 + $0x2] sm:$0xff]
        %v545 = vld [vmem:[#allocation2 + $0xa] sm:$0xff]
        %v546 = vld [vmem:[#allocation2 + $0x1a] sm:$0xff]
        %v547 = vld [vmem:[#allocation2 + $0x22] sm:$0xff]
        %v548 = vld [vmem:[#allocation2 + $0x32] sm:$0xff]
        %v549 = vld [vmem:[#allocation2 + $0x3a] sm:$0xff]
        %v550 = vld [vmem:[#allocation2 + $0x4a] sm:$0xff]
        %v551 = vld [vmem:[#allocation2 + $0x52] sm:$0xff]
        %v552 = vld [vmem:[#allocation2 + $0x62] sm:$0xff]
        %v553 = vld [vmem:[#allocation2 + $0x6a] sm:$0xff]
        %v554 = vld [vmem:[#allocation2 + $0x7a] sm:$0xff]
        %v555 = vld [vmem:[#allocation2 + $0x82] sm:$0xff]
        %v556 = vld [vmem:[#allocation2 + $0x92] sm:$0xff]
        %v557 = vld [vmem:[#allocation2 + $0x9a] sm:$0xff]
        %v558 = vld [vmem:[#allocation2 + $0xaa] sm:$0xff]
        %v559 = vld [vmem:[#allocation2 + $0xb2] sm:$0xff]
        %v560 = vld [vmem:[#allocation2 + $0xc2] sm:$0xff]
        %v561 = vld [vmem:[#allocation2 + $0xca] sm:$0xff]
        %v562 = vld [vmem:[#allocation2 + $0xda] sm:$0xff]
        %v563 = vld [vmem:[#allocation2 + $0xe2] sm:$0xff]
        %v564 = vld [vmem:[#allocation2 + $0xf2] sm:$0xff]
        %v565 = vld [vmem:[#allocation2 + $0xfa] sm:$0xff]
        %v566 = vld [vmem:[#allocation2 + $0x10a] sm:$0xff]
        %v567 = vld [vmem:[#allocation2 + $0x112] sm:$0xff]
        %v568 = vld [vmem:[#allocation2 + $0x122] sm:$0xff]
        %v569 = vld [vmem:[#allocation2 + $0x12a] sm:$0xff]
        %v570 = vld [vmem:[#allocation2 + $0x13a] sm:$0xff]
        %v571 = vld [vmem:[#allocation2 + $0x142] sm:$0xff]
        %v572 = vld [vmem:[#allocation2 + $0x152] sm:$0xff]
        %v573 = vld [vmem:[#allocation2 + $0x15a] sm:$0xff]
        %v574 = vld [vmem:[#allocation2 + $0x16a] sm:$0xff]
        %v575 = vld [vmem:[#allocation2 + $0x172] sm:$0xff]
        %v576 = vld [vmem:[#allocation2 + $0x182] sm:$0xff]
        %v577 = vld [vmem:[#allocation2 + $0x18a] sm:$0xff]
        %v578 = vld [vmem:[#allocation2 + $0x19a] sm:$0xff]
        %v579 = vld [vmem:[#allocation2 + $0x1a2] sm:$0xff]
        %612 = vrot.lane.b32.xlu0 %v474, 4
        %v613 = vpop.permute.xlu0 %612
        %614 = vrot.lane.b32.xlu0 %v475, 4
        %v615 = vpop.permute.xlu0 %614
        %616 = vrot.lane.b32.xlu0 %v476, 4
        %v617 = vpop.permute.xlu0 %616
        %618 = vrot.lane.b32.xlu0 %v477, 4
        %v619 = vpop.permute.xlu0 %618
        %620 = vrot.lane.b32.xlu0 %v478, 4
        %v621 = vpop.permute.xlu0 %620
        %622 = vrot.lane.b32.xlu0 %v479, 4
        %v623 = vpop.permute.xlu0 %622
        %624 = vrot.lane.b32.xlu0 %v480, 4
        %v625 = vpop.permute.xlu0 %624
        %626 = vrot.lane.b32.xlu0 %v481, 4
        %v627 = vpop.permute.xlu0 %626
        %628 = vrot.lane.b32.xlu0 %v482, 4
        %v629 = vpop.permute.xlu0 %628
        %630 = vrot.lane.b32.xlu0 %v483, 4
        %v631 = vpop.permute.xlu0 %630
        %632 = vrot.lane.b32.xlu0 %v484, 4
        %v633 = vpop.permute.xlu0 %632
        %634 = vrot.lane.b32.xlu0 %v485, 4
        %v635 = vpop.permute.xlu0 %634
        %636 = vrot.lane.b32.xlu0 %v486, 4
        %v637 = vpop.permute.xlu0 %636
        %638 = vrot.lane.b32.xlu0 %v487, 4
        %v639 = vpop.permute.xlu0 %638
        %640 = vrot.lane.b32.xlu0 %v488, 4
        %v641 = vpop.permute.xlu0 %640
        %642 = vrot.lane.b32.xlu0 %v489, 4
        %v643 = vpop.permute.xlu0 %642
        %644 = vrot.lane.b32.xlu0 %v490, 4
        %v645 = vpop.permute.xlu0 %644
        %646 = vrot.lane.b32.xlu0 %v491, 4
        %v647 = vpop.permute.xlu0 %646
        %648 = vrot.lane.b32.xlu0 %v492, 4
        %v649 = vpop.permute.xlu0 %648
        %650 = vrot.lane.b32.xlu0 %v493, 4
        %v651 = vpop.permute.xlu0 %650
        %652 = vrot.lane.b32.xlu0 %v494, 4
        %v653 = vpop.permute.xlu0 %652
        %654 = vrot.lane.b32.xlu0 %v495, 4
        %v655 = vpop.permute.xlu0 %654
        %656 = vrot.lane.b32.xlu0 %v496, 4
        %v657 = vpop.permute.xlu0 %656
        %658 = vrot.lane.b32.xlu0 %v497, 4
        %v659 = vpop.permute.xlu0 %658
        %660 = vrot.lane.b32.xlu0 %v498, 4
        %v661 = vpop.permute.xlu0 %660
        %662 = vrot.lane.b32.xlu0 %v499, 4
        %v663 = vpop.permute.xlu0 %662
        %664 = vrot.lane.b32.xlu0 %v500, 4
        %v665 = vpop.permute.xlu0 %664
        %666 = vrot.lane.b32.xlu0 %v501, 4
        %v667 = vpop.permute.xlu0 %666
        %668 = vrot.lane.b32.xlu0 %v502, 4
        %v669 = vpop.permute.xlu0 %668
        %670 = vrot.lane.b32.xlu0 %v503, 4
        %v671 = vpop.permute.xlu0 %670
        %672 = vrot.lane.b32.xlu0 %v504, 4
        %v673 = vpop.permute.xlu0 %672
        %674 = vrot.lane.b32.xlu0 %v505, 4
        %v675 = vpop.permute.xlu0 %674
        %710 = vrot.lane.b32.xlu0 %v476, 8
        %v711 = vpop.permute.xlu0 %710
        %712 = vrot.lane.b32.xlu0 %v477, 8
        %v713 = vpop.permute.xlu0 %712
        %714 = vrot.lane.b32.xlu0 %v478, 8
        %v715 = vpop.permute.xlu0 %714
        %716 = vrot.lane.b32.xlu0 %v479, 8
        %v717 = vpop.permute.xlu0 %716
        %718 = vrot.lane.b32.xlu0 %v480, 8
        %v719 = vpop.permute.xlu0 %718
        %720 = vrot.lane.b32.xlu0 %v481, 8
        %v721 = vpop.permute.xlu0 %720
        %722 = vrot.lane.b32.xlu0 %v482, 8
        %v723 = vpop.permute.xlu0 %722
        %724 = vrot.lane.b32.xlu0 %v483, 8
        %v725 = vpop.permute.xlu0 %724
        %726 = vrot.lane.b32.xlu0 %v484, 8
        %v727 = vpop.permute.xlu0 %726
        %728 = vrot.lane.b32.xlu0 %v485, 8
        %v729 = vpop.permute.xlu0 %728
        %730 = vrot.lane.b32.xlu0 %v486, 8
        %v731 = vpop.permute.xlu0 %730
        %732 = vrot.lane.b32.xlu0 %v487, 8
        %v733 = vpop.permute.xlu0 %732
        %734 = vrot.lane.b32.xlu0 %v488, 8
        %v735 = vpop.permute.xlu0 %734
        %736 = vrot.lane.b32.xlu0 %v489, 8
        %v737 = vpop.permute.xlu0 %736
        %738 = vrot.lane.b32.xlu0 %v490, 8
        %v739 = vpop.permute.xlu0 %738
        %740 = vrot.lane.b32.xlu0 %v491, 8
        %v741 = vpop.permute.xlu0 %740
        %742 = vrot.lane.b32.xlu0 %v492, 8
        %v743 = vpop.permute.xlu0 %742
        %744 = vrot.lane.b32.xlu0 %v493, 8
        %v745 = vpop.permute.xlu0 %744
        %746 = vrot.lane.b32.xlu0 %v494, 8
        %v747 = vpop.permute.xlu0 %746
        %748 = vrot.lane.b32.xlu0 %v495, 8
        %v749 = vpop.permute.xlu0 %748
        %750 = vrot.lane.b32.xlu0 %v496, 8
        %v751 = vpop.permute.xlu0 %750
        %752 = vrot.lane.b32.xlu0 %v497, 8
        %v753 = vpop.permute.xlu0 %752
        %754 = vrot.lane.b32.xlu0 %v498, 8
        %v755 = vpop.permute.xlu0 %754
        %756 = vrot.lane.b32.xlu0 %v499, 8
        %v757 = vpop.permute.xlu0 %756
        %758 = vrot.lane.b32.xlu0 %v500, 8
        %v759 = vpop.permute.xlu0 %758
        %760 = vrot.lane.b32.xlu0 %v501, 8
        %v761 = vpop.permute.xlu0 %760
        %762 = vrot.lane.b32.xlu0 %v502, 8
        %v763 = vpop.permute.xlu0 %762
        %764 = vrot.lane.b32.xlu0 %v503, 8
        %v765 = vpop.permute.xlu0 %764
        %766 = vrot.lane.b32.xlu0 %v504, 8
        %v767 = vpop.permute.xlu0 %766
        %768 = vrot.lane.b32.xlu0 %v505, 8
        %v769 = vpop.permute.xlu0 %768
        %770 = vrot.lane.b32.xlu0 %v506, 8
        %v771 = vpop.permute.xlu0 %770
        %772 = vrot.lane.b32.xlu0 %v507, 8
        %v773 = vpop.permute.xlu0 %772
        %838 = vrot.lane.b32.xlu0 %v508, 12
        %v839 = vpop.permute.xlu0 %838
        %840 = vrot.lane.b32.xlu0 %v509, 12
        %v841 = vpop.permute.xlu0 %840
        %842 = vrot.lane.b32.xlu0 %v510, 12
        %v843 = vpop.permute.xlu0 %842
        %844 = vrot.lane.b32.xlu0 %v511, 12
        %v845 = vpop.permute.xlu0 %844
        %846 = vrot.lane.b32.xlu0 %v512, 12
        %v847 = vpop.permute.xlu0 %846
        %848 = vrot.lane.b32.xlu0 %v513, 12
        %v849 = vpop.permute.xlu0 %848
        %850 = vrot.lane.b32.xlu0 %v514, 12
        %v851 = vpop.permute.xlu0 %850
        %852 = vrot.lane.b32.xlu0 %v515, 12
        %v853 = vpop.permute.xlu0 %852
        %854 = vrot.lane.b32.xlu0 %v516, 12
        %v855 = vpop.permute.xlu0 %854
        %856 = vrot.lane.b32.xlu0 %v517, 12
        %v857 = vpop.permute.xlu0 %856
        %858 = vrot.lane.b32.xlu0 %v518, 12
        %v859 = vpop.permute.xlu0 %858
        %860 = vrot.lane.b32.xlu0 %v519, 12
        %v861 = vpop.permute.xlu0 %860
        %862 = vrot.lane.b32.xlu0 %v520, 12
        %v863 = vpop.permute.xlu0 %862
        %864 = vrot.lane.b32.xlu0 %v521, 12
        %v865 = vpop.permute.xlu0 %864
        %866 = vrot.lane.b32.xlu0 %v522, 12
        %v867 = vpop.permute.xlu0 %866
        %868 = vrot.lane.b32.xlu0 %v523, 12
        %v869 = vpop.permute.xlu0 %868
        %870 = vrot.lane.b32.xlu0 %v524, 12
        %v871 = vpop.permute.xlu0 %870
        %872 = vrot.lane.b32.xlu0 %v525, 12
        %v873 = vpop.permute.xlu0 %872
        %874 = vrot.lane.b32.xlu0 %v526, 12
        %v875 = vpop.permute.xlu0 %874
        %876 = vrot.lane.b32.xlu0 %v527, 12
        %v877 = vpop.permute.xlu0 %876
        %878 = vrot.lane.b32.xlu0 %v528, 12
        %v879 = vpop.permute.xlu0 %878
        %880 = vrot.lane.b32.xlu0 %v529, 12
        %v881 = vpop.permute.xlu0 %880
        %882 = vrot.lane.b32.xlu0 %v530, 12
        %v883 = vpop.permute.xlu0 %882
        %884 = vrot.lane.b32.xlu0 %v531, 12
        %v885 = vpop.permute.xlu0 %884
        %886 = vrot.lane.b32.xlu0 %v532, 12
        %v887 = vpop.permute.xlu0 %886
        %888 = vrot.lane.b32.xlu0 %v533, 12
        %v889 = vpop.permute.xlu0 %888
        %890 = vrot.lane.b32.xlu0 %v534, 12
        %v891 = vpop.permute.xlu0 %890
        %892 = vrot.lane.b32.xlu0 %v535, 12
        %v893 = vpop.permute.xlu0 %892
        %894 = vrot.lane.b32.xlu0 %v536, 12
        %v895 = vpop.permute.xlu0 %894
        %896 = vrot.lane.b32.xlu0 %v537, 12
        %v897 = vpop.permute.xlu0 %896
        %898 = vrot.lane.b32.xlu0 %v538, 12
        %v899 = vpop.permute.xlu0 %898
        %900 = vrot.lane.b32.xlu0 %v539, 12
        %v901 = vpop.permute.xlu0 %900
        %936 = vrot.lane.b32.xlu0 %v510, 16
        %v937 = vpop.permute.xlu0 %936
        %938 = vrot.lane.b32.xlu0 %v511, 16
        %v939 = vpop.permute.xlu0 %938
        %940 = vrot.lane.b32.xlu0 %v512, 16
        %v941 = vpop.permute.xlu0 %940
        %942 = vrot.lane.b32.xlu0 %v513, 16
        %v943 = vpop.permute.xlu0 %942
        %944 = vrot.lane.b32.xlu0 %v514, 16
        %v945 = vpop.permute.xlu0 %944
        %946 = vrot.lane.b32.xlu0 %v515, 16
        %v947 = vpop.permute.xlu0 %946
        %948 = vrot.lane.b32.xlu0 %v516, 16
        %v949 = vpop.permute.xlu0 %948
        %950 = vrot.lane.b32.xlu0 %v517, 16
        %v951 = vpop.permute.xlu0 %950
        %952 = vrot.lane.b32.xlu0 %v518, 16
        %v953 = vpop.permute.xlu0 %952
        %954 = vrot.lane.b32.xlu0 %v519, 16
        %v955 = vpop.permute.xlu0 %954
        %956 = vrot.lane.b32.xlu0 %v520, 16
        %v957 = vpop.permute.xlu0 %956
        %958 = vrot.lane.b32.xlu0 %v521, 16
        %v959 = vpop.permute.xlu0 %958
        %960 = vrot.lane.b32.xlu0 %v522, 16
        %v961 = vpop.permute.xlu0 %960
        %962 = vrot.lane.b32.xlu0 %v523, 16
        %v963 = vpop.permute.xlu0 %962
        %964 = vrot.lane.b32.xlu0 %v524, 16
        %v965 = vpop.permute.xlu0 %964
        %966 = vrot.lane.b32.xlu0 %v525, 16
        %v967 = vpop.permute.xlu0 %966
        %968 = vrot.lane.b32.xlu0 %v526, 16
        %v969 = vpop.permute.xlu0 %968
        %970 = vrot.lane.b32.xlu0 %v527, 16
        %v971 = vpop.permute.xlu0 %970
        %972 = vrot.lane.b32.xlu0 %v528, 16
        %v973 = vpop.permute.xlu0 %972
        %974 = vrot.lane.b32.xlu0 %v529, 16
        %v975 = vpop.permute.xlu0 %974
        %976 = vrot.lane.b32.xlu0 %v530, 16
        %v977 = vpop.permute.xlu0 %976
        %978 = vrot.lane.b32.xlu0 %v531, 16
        %v979 = vpop.permute.xlu0 %978
        %980 = vrot.lane.b32.xlu0 %v532, 16
        %v981 = vpop.permute.xlu0 %980
        %982 = vrot.lane.b32.xlu0 %v533, 16
        %v983 = vpop.permute.xlu0 %982
        %984 = vrot.lane.b32.xlu0 %v534, 16
        %v985 = vpop.permute.xlu0 %984
        %986 = vrot.lane.b32.xlu0 %v535, 16
        %v987 = vpop.permute.xlu0 %986
        %988 = vrot.lane.b32.xlu0 %v536, 16
        %v989 = vpop.permute.xlu0 %988
        %990 = vrot.lane.b32.xlu0 %v537, 16
        %v991 = vpop.permute.xlu0 %990
        %992 = vrot.lane.b32.xlu0 %v538, 16
        %v993 = vpop.permute.xlu0 %992
        %994 = vrot.lane.b32.xlu0 %v539, 16
        %v995 = vpop.permute.xlu0 %994
        %996 = vrot.lane.b32.xlu0 %v540, 16
        %v997 = vpop.permute.xlu0 %996
        %998 = vrot.lane.b32.xlu0 %v541, 16
        %v999 = vpop.permute.xlu0 %998
        %1034 = vrot.lane.b32.xlu0 %v512, 20
        %v1035 = vpop.permute.xlu0 %1034
        %1036 = vrot.lane.b32.xlu0 %v513, 20
        %v1037 = vpop.permute.xlu0 %1036
        %1038 = vrot.lane.b32.xlu0 %v514, 20
        %v1039 = vpop.permute.xlu0 %1038
        %1040 = vrot.lane.b32.xlu0 %v515, 20
        %v1041 = vpop.permute.xlu0 %1040
        %1042 = vrot.lane.b32.xlu0 %v516, 20
        %v1043 = vpop.permute.xlu0 %1042
        %1044 = vrot.lane.b32.xlu0 %v517, 20
        %v1045 = vpop.permute.xlu0 %1044
        %1046 = vrot.lane.b32.xlu0 %v518, 20
        %v1047 = vpop.permute.xlu0 %1046
        %1048 = vrot.lane.b32.xlu0 %v519, 20
        %v1049 = vpop.permute.xlu0 %1048
        %1050 = vrot.lane.b32.xlu0 %v520, 20
        %v1051 = vpop.permute.xlu0 %1050
        %1052 = vrot.lane.b32.xlu0 %v521, 20
        %v1053 = vpop.permute.xlu0 %1052
        %1054 = vrot.lane.b32.xlu0 %v522, 20
        %v1055 = vpop.permute.xlu0 %1054
        %1056 = vrot.lane.b32.xlu0 %v523, 20
        %v1057 = vpop.permute.xlu0 %1056
        %1058 = vrot.lane.b32.xlu0 %v524, 20
        %v1059 = vpop.permute.xlu0 %1058
        %1060 = vrot.lane.b32.xlu0 %v525, 20
        %v1061 = vpop.permute.xlu0 %1060
        %1062 = vrot.lane.b32.xlu0 %v526, 20
        %v1063 = vpop.permute.xlu0 %1062
        %1064 = vrot.lane.b32.xlu0 %v527, 20
        %v1065 = vpop.permute.xlu0 %1064
        %1066 = vrot.lane.b32.xlu0 %v528, 20
        %v1067 = vpop.permute.xlu0 %1066
        %1068 = vrot.lane.b32.xlu0 %v529, 20
        %v1069 = vpop.permute.xlu0 %1068
        %1070 = vrot.lane.b32.xlu0 %v530, 20
        %v1071 = vpop.permute.xlu0 %1070
        %1072 = vrot.lane.b32.xlu0 %v531, 20
        %v1073 = vpop.permute.xlu0 %1072
        %1074 = vrot.lane.b32.xlu0 %v532, 20
        %v1075 = vpop.permute.xlu0 %1074
        %1076 = vrot.lane.b32.xlu0 %v533, 20
        %v1077 = vpop.permute.xlu0 %1076
        %1078 = vrot.lane.b32.xlu0 %v534, 20
        %v1079 = vpop.permute.xlu0 %1078
        %1080 = vrot.lane.b32.xlu0 %v535, 20
        %v1081 = vpop.permute.xlu0 %1080
        %1082 = vrot.lane.b32.xlu0 %v536, 20
        %v1083 = vpop.permute.xlu0 %1082
        %1084 = vrot.lane.b32.xlu0 %v537, 20
        %v1085 = vpop.permute.xlu0 %1084
        %1086 = vrot.lane.b32.xlu0 %v538, 20
        %v1087 = vpop.permute.xlu0 %1086
        %1088 = vrot.lane.b32.xlu0 %v539, 20
        %v1089 = vpop.permute.xlu0 %1088
        %1090 = vrot.lane.b32.xlu0 %v540, 20
        %v1091 = vpop.permute.xlu0 %1090
        %1092 = vrot.lane.b32.xlu0 %v541, 20
        %v1093 = vpop.permute.xlu0 %1092
        %1094 = vrot.lane.b32.xlu0 %v542, 20
        %v1095 = vpop.permute.xlu0 %1094
        %1096 = vrot.lane.b32.xlu0 %v543, 20
        %v1097 = vpop.permute.xlu0 %1096
        %1162 = vrot.lane.b32.xlu0 %v544, 24
        %v1163 = vpop.permute.xlu0 %1162
        %1164 = vrot.lane.b32.xlu0 %v545, 24
        %v1165 = vpop.permute.xlu0 %1164
        %1166 = vrot.lane.b32.xlu0 %v546, 24
        %v1167 = vpop.permute.xlu0 %1166
        %1168 = vrot.lane.b32.xlu0 %v547, 24
        %v1169 = vpop.permute.xlu0 %1168
        %1170 = vrot.lane.b32.xlu0 %v548, 24
        %v1171 = vpop.permute.xlu0 %1170
        %1172 = vrot.lane.b32.xlu0 %v549, 24
        %v1173 = vpop.permute.xlu0 %1172
        %1174 = vrot.lane.b32.xlu0 %v550, 24
        %v1175 = vpop.permute.xlu0 %1174
        %1176 = vrot.lane.b32.xlu0 %v551, 24
        %v1177 = vpop.permute.xlu0 %1176
        %1178 = vrot.lane.b32.xlu0 %v552, 24
        %v1179 = vpop.permute.xlu0 %1178
        %1180 = vrot.lane.b32.xlu0 %v553, 24
        %v1181 = vpop.permute.xlu0 %1180
        %1182 = vrot.lane.b32.xlu0 %v554, 24
        %v1183 = vpop.permute.xlu0 %1182
        %1184 = vrot.lane.b32.xlu0 %v555, 24
        %v1185 = vpop.permute.xlu0 %1184
        %1186 = vrot.lane.b32.xlu0 %v556, 24
        %v1187 = vpop.permute.xlu0 %1186
        %1188 = vrot.lane.b32.xlu0 %v557, 24
        %v1189 = vpop.permute.xlu0 %1188
        %1190 = vrot.lane.b32.xlu0 %v558, 24
        %v1191 = vpop.permute.xlu0 %1190
        %1192 = vrot.lane.b32.xlu0 %v559, 24
        %v1193 = vpop.permute.xlu0 %1192
        %1194 = vrot.lane.b32.xlu0 %v560, 24
        %v1195 = vpop.permute.xlu0 %1194
        %1196 = vrot.lane.b32.xlu0 %v561, 24
        %v1197 = vpop.permute.xlu0 %1196
        %1198 = vrot.lane.b32.xlu0 %v562, 24
        %v1199 = vpop.permute.xlu0 %1198
        %1200 = vrot.lane.b32.xlu0 %v563, 24
        %v1201 = vpop.permute.xlu0 %1200
        %1202 = vrot.lane.b32.xlu0 %v564, 24
        %v1203 = vpop.permute.xlu0 %1202
        %1204 = vrot.lane.b32.xlu0 %v565, 24
        %v1205 = vpop.permute.xlu0 %1204
        %1206 = vrot.lane.b32.xlu0 %v566, 24
        %v1207 = vpop.permute.xlu0 %1206
        %1208 = vrot.lane.b32.xlu0 %v567, 24
        %v1209 = vpop.permute.xlu0 %1208
        %1210 = vrot.lane.b32.xlu0 %v568, 24
        %v1211 = vpop.permute.xlu0 %1210
        %1212 = vrot.lane.b32.xlu0 %v569, 24
        %v1213 = vpop.permute.xlu0 %1212
        %1214 = vrot.lane.b32.xlu0 %v570, 24
        %v1215 = vpop.permute.xlu0 %1214
        %1216 = vrot.lane.b32.xlu0 %v571, 24
        %v1217 = vpop.permute.xlu0 %1216
        %1218 = vrot.lane.b32.xlu0 %v572, 24
        %v1219 = vpop.permute.xlu0 %1218
        %1220 = vrot.lane.b32.xlu0 %v573, 24
        %v1221 = vpop.permute.xlu0 %1220
        %1222 = vrot.lane.b32.xlu0 %v574, 24
        %v1223 = vpop.permute.xlu0 %1222
        %1224 = vrot.lane.b32.xlu0 %v575, 24
        %v1225 = vpop.permute.xlu0 %1224
        %1260 = vrot.lane.b32.xlu0 %v546, 28
        %v1261 = vpop.permute.xlu0 %1260
        %1262 = vrot.lane.b32.xlu0 %v547, 28
        %v1263 = vpop.permute.xlu0 %1262
        %1264 = vrot.lane.b32.xlu0 %v548, 28
        %v1265 = vpop.permute.xlu0 %1264
        %1266 = vrot.lane.b32.xlu0 %v549, 28
        %v1267 = vpop.permute.xlu0 %1266
        %1268 = vrot.lane.b32.xlu0 %v550, 28
        %v1269 = vpop.permute.xlu0 %1268
        %1270 = vrot.lane.b32.xlu0 %v551, 28
        %v1271 = vpop.permute.xlu0 %1270
        %1272 = vrot.lane.b32.xlu0 %v552, 28
        %v1273 = vpop.permute.xlu0 %1272
        %1274 = vrot.lane.b32.xlu0 %v553, 28
        %v1275 = vpop.permute.xlu0 %1274
        %1276 = vrot.lane.b32.xlu0 %v554, 28
        %v1277 = vpop.permute.xlu0 %1276
        %1278 = vrot.lane.b32.xlu0 %v555, 28
        %v1279 = vpop.permute.xlu0 %1278
        %1280 = vrot.lane.b32.xlu0 %v556, 28
        %v1281 = vpop.permute.xlu0 %1280
        %1282 = vrot.lane.b32.xlu0 %v557, 28
        %v1283 = vpop.permute.xlu0 %1282
        %1284 = vrot.lane.b32.xlu0 %v558, 28
        %v1285 = vpop.permute.xlu0 %1284
        %1286 = vrot.lane.b32.xlu0 %v559, 28
        %v1287 = vpop.permute.xlu0 %1286
        %1288 = vrot.lane.b32.xlu0 %v560, 28
        %v1289 = vpop.permute.xlu0 %1288
        %1290 = vrot.lane.b32.xlu0 %v561, 28
        %v1291 = vpop.permute.xlu0 %1290
        %1292 = vrot.lane.b32.xlu0 %v562, 28
        %v1293 = vpop.permute.xlu0 %1292
        %1294 = vrot.lane.b32.xlu0 %v563, 28
        %v1295 = vpop.permute.xlu0 %1294
        %1296 = vrot.lane.b32.xlu0 %v564, 28
        %v1297 = vpop.permute.xlu0 %1296
        %1298 = vrot.lane.b32.xlu0 %v565, 28
        %v1299 = vpop.permute.xlu0 %1298
        %1300 = vrot.lane.b32.xlu0 %v566, 28
        %v1301 = vpop.permute.xlu0 %1300
        %1302 = vrot.lane.b32.xlu0 %v567, 28
        %v1303 = vpop.permute.xlu0 %1302
        %1304 = vrot.lane.b32.xlu0 %v568, 28
        %v1305 = vpop.permute.xlu0 %1304
        %1306 = vrot.lane.b32.xlu0 %v569, 28
        %v1307 = vpop.permute.xlu0 %1306
        %1308 = vrot.lane.b32.xlu0 %v570, 28
        %v1309 = vpop.permute.xlu0 %1308
        %1310 = vrot.lane.b32.xlu0 %v571, 28
        %v1311 = vpop.permute.xlu0 %1310
        %1312 = vrot.lane.b32.xlu0 %v572, 28
        %v1313 = vpop.permute.xlu0 %1312
        %1314 = vrot.lane.b32.xlu0 %v573, 28
        %v1315 = vpop.permute.xlu0 %1314
        %1316 = vrot.lane.b32.xlu0 %v574, 28
        %v1317 = vpop.permute.xlu0 %1316
        %1318 = vrot.lane.b32.xlu0 %v575, 28
        %v1319 = vpop.permute.xlu0 %1318
        %1320 = vrot.lane.b32.xlu0 %v576, 28
        %v1321 = vpop.permute.xlu0 %1320
        %1322 = vrot.lane.b32.xlu0 %v577, 28
        %v1323 = vpop.permute.xlu0 %1322
        %1358 = vrot.lane.b32.xlu0 %v548, 32
        %v1359 = vpop.permute.xlu0 %1358
        %1360 = vrot.lane.b32.xlu0 %v549, 32
        %v1361 = vpop.permute.xlu0 %1360
        %1362 = vrot.lane.b32.xlu0 %v550, 32
        %v1363 = vpop.permute.xlu0 %1362
        %1364 = vrot.lane.b32.xlu0 %v551, 32
        %v1365 = vpop.permute.xlu0 %1364
        %1366 = vrot.lane.b32.xlu0 %v552, 32
        %v1367 = vpop.permute.xlu0 %1366
        %1368 = vrot.lane.b32.xlu0 %v553, 32
        %v1369 = vpop.permute.xlu0 %1368
        %1370 = vrot.lane.b32.xlu0 %v554, 32
        %v1371 = vpop.permute.xlu0 %1370
        %1372 = vrot.lane.b32.xlu0 %v555, 32
        %v1373 = vpop.permute.xlu0 %1372
        %1374 = vrot.lane.b32.xlu0 %v556, 32
        %v1375 = vpop.permute.xlu0 %1374
        %1376 = vrot.lane.b32.xlu0 %v557, 32
        %v1377 = vpop.permute.xlu0 %1376
        %1378 = vrot.lane.b32.xlu0 %v558, 32
        %v1379 = vpop.permute.xlu0 %1378
        %1380 = vrot.lane.b32.xlu0 %v559, 32
        %v1381 = vpop.permute.xlu0 %1380
        %1382 = vrot.lane.b32.xlu0 %v560, 32
        %v1383 = vpop.permute.xlu0 %1382
        %1384 = vrot.lane.b32.xlu0 %v561, 32
        %v1385 = vpop.permute.xlu0 %1384
        %1386 = vrot.lane.b32.xlu0 %v562, 32
        %v1387 = vpop.permute.xlu0 %1386
        %1388 = vrot.lane.b32.xlu0 %v563, 32
        %v1389 = vpop.permute.xlu0 %1388
        %1390 = vrot.lane.b32.xlu0 %v564, 32
        %v1391 = vpop.permute.xlu0 %1390
        %1392 = vrot.lane.b32.xlu0 %v565, 32
        %v1393 = vpop.permute.xlu0 %1392
        %1394 = vrot.lane.b32.xlu0 %v566, 32
        %v1395 = vpop.permute.xlu0 %1394
        %1396 = vrot.lane.b32.xlu0 %v567, 32
        %v1397 = vpop.permute.xlu0 %1396
        %1398 = vrot.lane.b32.xlu0 %v568, 32
        %v1399 = vpop.permute.xlu0 %1398
        %1400 = vrot.lane.b32.xlu0 %v569, 32
        %v1401 = vpop.permute.xlu0 %1400
        %1402 = vrot.lane.b32.xlu0 %v570, 32
        %v1403 = vpop.permute.xlu0 %1402
        %1404 = vrot.lane.b32.xlu0 %v571, 32
        %v1405 = vpop.permute.xlu0 %1404
        %1406 = vrot.lane.b32.xlu0 %v572, 32
        %v1407 = vpop.permute.xlu0 %1406
        %1408 = vrot.lane.b32.xlu0 %v573, 32
        %v1409 = vpop.permute.xlu0 %1408
        %1410 = vrot.lane.b32.xlu0 %v574, 32
        %v1411 = vpop.permute.xlu0 %1410
        %1412 = vrot.lane.b32.xlu0 %v575, 32
        %v1413 = vpop.permute.xlu0 %1412
        %1414 = vrot.lane.b32.xlu0 %v576, 32
        %v1415 = vpop.permute.xlu0 %1414
        %1416 = vrot.lane.b32.xlu0 %v577, 32
        %v1417 = vpop.permute.xlu0 %1416
        %1418 = vrot.lane.b32.xlu0 %v578, 32
        %v1419 = vpop.permute.xlu0 %1418
        %1420 = vrot.lane.b32.xlu0 %v579, 32
        %v1421 = vpop.permute.xlu0 %1420
        %v1454 = vsel %vm397, %v472, %v613
        %v1455 = vsel %vm397, %v473, %v615
        %v1456 = vsel %vm397, %v474, %v617
        %v1457 = vsel %vm397, %v475, %v619
        %v1458 = vsel %vm397, %v476, %v621
        %v1459 = vsel %vm397, %v477, %v623
        %v1460 = vsel %vm397, %v478, %v625
        %v1461 = vsel %vm397, %v479, %v627
        %v1462 = vsel %vm397, %v480, %v629
        %v1463 = vsel %vm397, %v481, %v631
        %v1464 = vsel %vm397, %v482, %v633
        %v1465 = vsel %vm397, %v483, %v635
        %v1466 = vsel %vm397, %v484, %v637
        %v1467 = vsel %vm397, %v485, %v639
        %v1468 = vsel %vm397, %v486, %v641
        %v1469 = vsel %vm397, %v487, %v643
        %v1470 = vsel %vm397, %v488, %v645
        %v1471 = vsel %vm397, %v489, %v647
        %v1472 = vsel %vm397, %v490, %v649
        %v1473 = vsel %vm397, %v491, %v651
        %v1474 = vsel %vm397, %v492, %v653
        %v1475 = vsel %vm397, %v493, %v655
        %v1476 = vsel %vm397, %v494, %v657
        %v1477 = vsel %vm397, %v495, %v659
        %v1478 = vsel %vm397, %v496, %v661
        %v1479 = vsel %vm397, %v497, %v663
        %v1480 = vsel %vm397, %v498, %v665
        %v1481 = vsel %vm397, %v499, %v667
        %v1482 = vsel %vm397, %v500, %v669
        %v1483 = vsel %vm397, %v501, %v671
        %v1484 = vsel %vm397, %v502, %v673
        %v1485 = vsel %vm397, %v503, %v675
        %vm1486 = vcmask 64512
        %v1487 = vsel %vm1486, %v1454, %v711
        %v1488 = vsel %vm1486, %v1455, %v713
        %v1489 = vsel %vm1486, %v1456, %v715
        %v1490 = vsel %vm1486, %v1457, %v717
        %v1491 = vsel %vm1486, %v1458, %v719
        %v1492 = vsel %vm1486, %v1459, %v721
        %v1493 = vsel %vm1486, %v1460, %v723
        %v1494 = vsel %vm1486, %v1461, %v725
        %v1495 = vsel %vm1486, %v1462, %v727
        %v1496 = vsel %vm1486, %v1463, %v729
        %v1497 = vsel %vm1486, %v1464, %v731
        %v1498 = vsel %vm1486, %v1465, %v733
        %v1499 = vsel %vm1486, %v1466, %v735
        %v1500 = vsel %vm1486, %v1467, %v737
        %v1501 = vsel %vm1486, %v1468, %v739
        %v1502 = vsel %vm1486, %v1469, %v741
        %v1503 = vsel %vm1486, %v1470, %v743
        %v1504 = vsel %vm1486, %v1471, %v745
        %v1505 = vsel %vm1486, %v1472, %v747
        %v1506 = vsel %vm1486, %v1473, %v749
        %v1507 = vsel %vm1486, %v1474, %v751
        %v1508 = vsel %vm1486, %v1475, %v753
        %v1509 = vsel %vm1486, %v1476, %v755
        %v1510 = vsel %vm1486, %v1477, %v757
        %v1511 = vsel %vm1486, %v1478, %v759
        %v1512 = vsel %vm1486, %v1479, %v761
        %v1513 = vsel %vm1486, %v1480, %v763
        %v1514 = vsel %vm1486, %v1481, %v765
        %v1515 = vsel %vm1486, %v1482, %v767
        %v1516 = vsel %vm1486, %v1483, %v769
        %v1517 = vsel %vm1486, %v1484, %v771
        %v1518 = vsel %vm1486, %v1485, %v773
        %vm1519 = vcmask 97280
        %v1520 = vsel %vm1519, %v1487, %v839
        %v1521 = vsel %vm1519, %v1488, %v841
        %v1522 = vsel %vm1519, %v1489, %v843
        %v1523 = vsel %vm1519, %v1490, %v845
        %v1524 = vsel %vm1519, %v1491, %v847
        %v1525 = vsel %vm1519, %v1492, %v849
        %v1526 = vsel %vm1519, %v1493, %v851
        %v1527 = vsel %vm1519, %v1494, %v853
        %v1528 = vsel %vm1519, %v1495, %v855
        %v1529 = vsel %vm1519, %v1496, %v857
        %v1530 = vsel %vm1519, %v1497, %v859
        %v1531 = vsel %vm1519, %v1498, %v861
        %v1532 = vsel %vm1519, %v1499, %v863
        %v1533 = vsel %vm1519, %v1500, %v865
        %v1534 = vsel %vm1519, %v1501, %v867
        %v1535 = vsel %vm1519, %v1502, %v869
        %v1536 = vsel %vm1519, %v1503, %v871
        %v1537 = vsel %vm1519, %v1504, %v873
        %v1538 = vsel %vm1519, %v1505, %v875
        %v1539 = vsel %vm1519, %v1506, %v877
        %v1540 = vsel %vm1519, %v1507, %v879
        %v1541 = vsel %vm1519, %v1508, %v881
        %v1542 = vsel %vm1519, %v1509, %v883
        %v1543 = vsel %vm1519, %v1510, %v885
        %v1544 = vsel %vm1519, %v1511, %v887
        %v1545 = vsel %vm1519, %v1512, %v889
        %v1546 = vsel %vm1519, %v1513, %v891
        %v1547 = vsel %vm1519, %v1514, %v893
        %v1548 = vsel %vm1519, %v1515, %v895
        %v1549 = vsel %vm1519, %v1516, %v897
        %v1550 = vsel %vm1519, %v1517, %v899
        %v1551 = vsel %vm1519, %v1518, %v901
        %vm1552 = vcmask 130048
        %v1553 = vsel %vm1552, %v1520, %v937
        %v1554 = vsel %vm1552, %v1521, %v939
        %v1555 = vsel %vm1552, %v1522, %v941
        %v1556 = vsel %vm1552, %v1523, %v943
        %v1557 = vsel %vm1552, %v1524, %v945
        %v1558 = vsel %vm1552, %v1525, %v947
        %v1559 = vsel %vm1552, %v1526, %v949
        %v1560 = vsel %vm1552, %v1527, %v951
        %v1561 = vsel %vm1552, %v1528, %v953
        %v1562 = vsel %vm1552, %v1529, %v955
        %v1563 = vsel %vm1552, %v1530, %v957
        %v1564 = vsel %vm1552, %v1531, %v959
        %v1565 = vsel %vm1552, %v1532, %v961
        %v1566 = vsel %vm1552, %v1533, %v963
        %v1567 = vsel %vm1552, %v1534, %v965
        %v1568 = vsel %vm1552, %v1535, %v967
        %v1569 = vsel %vm1552, %v1536, %v969
        %v1570 = vsel %vm1552, %v1537, %v971
        %v1571 = vsel %vm1552, %v1538, %v973
        %v1572 = vsel %vm1552, %v1539, %v975
        %v1573 = vsel %vm1552, %v1540, %v977
        %v1574 = vsel %vm1552, %v1541, %v979
        %v1575 = vsel %vm1552, %v1542, %v981
        %v1576 = vsel %vm1552, %v1543, %v983
        %v1577 = vsel %vm1552, %v1544, %v985
        %v1578 = vsel %vm1552, %v1545, %v987
        %v1579 = vsel %vm1552, %v1546, %v989
        %v1580 = vsel %vm1552, %v1547, %v991
        %v1581 = vsel %vm1552, %v1548, %v993
        %v1582 = vsel %vm1552, %v1549, %v995
        %v1583 = vsel %vm1552, %v1550, %v997
        %v1584 = vsel %vm1552, %v1551, %v999
        %vm1585 = vcmask 162816
        %v1586 = vsel %vm1585, %v1553, %v1035
        %v1587 = vsel %vm1585, %v1554, %v1037
        %v1588 = vsel %vm1585, %v1555, %v1039
        %v1589 = vsel %vm1585, %v1556, %v1041
        %v1590 = vsel %vm1585, %v1557, %v1043
        %v1591 = vsel %vm1585, %v1558, %v1045
        %v1592 = vsel %vm1585, %v1559, %v1047
        %v1593 = vsel %vm1585, %v1560, %v1049
        %v1594 = vsel %vm1585, %v1561, %v1051
        %v1595 = vsel %vm1585, %v1562, %v1053
        %v1596 = vsel %vm1585, %v1563, %v1055
        %v1597 = vsel %vm1585, %v1564, %v1057
        %v1598 = vsel %vm1585, %v1565, %v1059
        %v1599 = vsel %vm1585, %v1566, %v1061
        %v1600 = vsel %vm1585, %v1567, %v1063
        %v1601 = vsel %vm1585, %v1568, %v1065
        %v1602 = vsel %vm1585, %v1569, %v1067
        %v1603 = vsel %vm1585, %v1570, %v1069
        %v1604 = vsel %vm1585, %v1571, %v1071
        %v1605 = vsel %vm1585, %v1572, %v1073
        %v1606 = vsel %vm1585, %v1573, %v1075
        %v1607 = vsel %vm1585, %v1574, %v1077
        %v1608 = vsel %vm1585, %v1575, %v1079
        %v1609 = vsel %vm1585, %v1576, %v1081
        %v1610 = vsel %vm1585, %v1577, %v1083
        %v1611 = vsel %vm1585, %v1578, %v1085
        %v1612 = vsel %vm1585, %v1579, %v1087
        %v1613 = vsel %vm1585, %v1580, %v1089
        %v1614 = vsel %vm1585, %v1581, %v1091
        %v1615 = vsel %vm1585, %v1582, %v1093
        %v1616 = vsel %vm1585, %v1583, %v1095
        %v1617 = vsel %vm1585, %v1584, %v1097
        %vm1618 = vcmask 195584
        %v1619 = vsel %vm1618, %v1586, %v1163
        %v1620 = vsel %vm1618, %v1587, %v1165
        %v1621 = vsel %vm1618, %v1588, %v1167
        %v1622 = vsel %vm1618, %v1589, %v1169
        %v1623 = vsel %vm1618, %v1590, %v1171
        %v1624 = vsel %vm1618, %v1591, %v1173
        %v1625 = vsel %vm1618, %v1592, %v1175
        %v1626 = vsel %vm1618, %v1593, %v1177
        %v1627 = vsel %vm1618, %v1594, %v1179
        %v1628 = vsel %vm1618, %v1595, %v1181
        %v1629 = vsel %vm1618, %v1596, %v1183
        %v1630 = vsel %vm1618, %v1597, %v1185
        %v1631 = vsel %vm1618, %v1598, %v1187
        %v1632 = vsel %vm1618, %v1599, %v1189
        %v1633 = vsel %vm1618, %v1600, %v1191
        %v1634 = vsel %vm1618, %v1601, %v1193
        %v1635 = vsel %vm1618, %v1602, %v1195
        %v1636 = vsel %vm1618, %v1603, %v1197
        %v1637 = vsel %vm1618, %v1604, %v1199
        %v1638 = vsel %vm1618, %v1605, %v1201
        %v1639 = vsel %vm1618, %v1606, %v1203
        %v1640 = vsel %vm1618, %v1607, %v1205
        %v1641 = vsel %vm1618, %v1608, %v1207
        %v1642 = vsel %vm1618, %v1609, %v1209
        %v1643 = vsel %vm1618, %v1610, %v1211
        %v1644 = vsel %vm1618, %v1611, %v1213
        %v1645 = vsel %vm1618, %v1612, %v1215
        %v1646 = vsel %vm1618, %v1613, %v1217
        %v1647 = vsel %vm1618, %v1614, %v1219
        %v1648 = vsel %vm1618, %v1615, %v1221
        %v1649 = vsel %vm1618, %v1616, %v1223
        %v1650 = vsel %vm1618, %v1617, %v1225
        %vm1651 = vcmask 228352
        %v1652 = vsel %vm1651, %v1619, %v1261
        %v1653 = vsel %vm1651, %v1620, %v1263
        %v1654 = vsel %vm1651, %v1621, %v1265
        %v1655 = vsel %vm1651, %v1622, %v1267
        %v1656 = vsel %vm1651, %v1623, %v1269
        %v1657 = vsel %vm1651, %v1624, %v1271
        %v1658 = vsel %vm1651, %v1625, %v1273
        %v1659 = vsel %vm1651, %v1626, %v1275
        %v1660 = vsel %vm1651, %v1627, %v1277
        %v1661 = vsel %vm1651, %v1628, %v1279
        %v1662 = vsel %vm1651, %v1629, %v1281
        %v1663 = vsel %vm1651, %v1630, %v1283
        %v1664 = vsel %vm1651, %v1631, %v1285
        %v1665 = vsel %vm1651, %v1632, %v1287
        %v1666 = vsel %vm1651, %v1633, %v1289
        %v1667 = vsel %vm1651, %v1634, %v1291
        %v1668 = vsel %vm1651, %v1635, %v1293
        %v1669 = vsel %vm1651, %v1636, %v1295
        %v1670 = vsel %vm1651, %v1637, %v1297
        %v1671 = vsel %vm1651, %v1638, %v1299
        %v1672 = vsel %vm1651, %v1639, %v1301
        %v1673 = vsel %vm1651, %v1640, %v1303
        %v1674 = vsel %vm1651, %v1641, %v1305
        %v1675 = vsel %vm1651, %v1642, %v1307
        %v1676 = vsel %vm1651, %v1643, %v1309
        %v1677 = vsel %vm1651, %v1644, %v1311
        %v1678 = vsel %vm1651, %v1645, %v1313
        %v1679 = vsel %vm1651, %v1646, %v1315
        %v1680 = vsel %vm1651, %v1647, %v1317
        %v1681 = vsel %vm1651, %v1648, %v1319
        %v1682 = vsel %vm1651, %v1649, %v1321
        %v1683 = vsel %vm1651, %v1650, %v1323
        %vm1684 = vcmask 261120
        %v1685 = vsel %vm1684, %v1652, %v1359
        %v1686 = vsel %vm1684, %v1653, %v1361
        %v1687 = vsel %vm1684, %v1654, %v1363
        %v1688 = vsel %vm1684, %v1655, %v1365
        %v1689 = vsel %vm1684, %v1656, %v1367
        %v1690 = vsel %vm1684, %v1657, %v1369
        %v1691 = vsel %vm1684, %v1658, %v1371
        %v1692 = vsel %vm1684, %v1659, %v1373
        %v1693 = vsel %vm1684, %v1660, %v1375
        %v1694 = vsel %vm1684, %v1661, %v1377
        %v1695 = vsel %vm1684, %v1662, %v1379
        %v1696 = vsel %vm1684, %v1663, %v1381
        %v1697 = vsel %vm1684, %v1664, %v1383
        %v1698 = vsel %vm1684, %v1665, %v1385
        %v1699 = vsel %vm1684, %v1666, %v1387
        %v1700 = vsel %vm1684, %v1667, %v1389
        %v1701 = vsel %vm1684, %v1668, %v1391
        %v1702 = vsel %vm1684, %v1669, %v1393
        %v1703 = vsel %vm1684, %v1670, %v1395
        %v1704 = vsel %vm1684, %v1671, %v1397
        %v1705 = vsel %vm1684, %v1672, %v1399
        %v1706 = vsel %vm1684, %v1673, %v1401
        %v1707 = vsel %vm1684, %v1674, %v1403
        %v1708 = vsel %vm1684, %v1675, %v1405
        %v1709 = vsel %vm1684, %v1676, %v1407
        %v1710 = vsel %vm1684, %v1677, %v1409
        %v1711 = vsel %vm1684, %v1678, %v1411
        %v1712 = vsel %vm1684, %v1679, %v1413
        %v1713 = vsel %vm1684, %v1680, %v1415
        %v1714 = vsel %vm1684, %v1681, %v1417
        %v1715 = vsel %vm1684, %v1682, %v1419
        %v1716 = vsel %vm1684, %v1683, %v1421
        %v1717 = vpack.c.bf16 %v1686, %v1685
        %v1718 = vpack.c.bf16 %v1688, %v1687
        %v1719 = vpack.c.bf16 %v1690, %v1689
        %v1720 = vpack.c.bf16 %v1692, %v1691
        %v1721 = vpack.c.bf16 %v1694, %v1693
        %v1722 = vpack.c.bf16 %v1696, %v1695
        %v1723 = vpack.c.bf16 %v1698, %v1697
        %v1724 = vpack.c.bf16 %v1700, %v1699
        %v1725 = vpack.c.bf16 %v1702, %v1701
        %v1726 = vpack.c.bf16 %v1704, %v1703
        %v1727 = vpack.c.bf16 %v1706, %v1705
        %v1728 = vpack.c.bf16 %v1708, %v1707
        %v1729 = vpack.c.bf16 %v1710, %v1709
        %v1730 = vpack.c.bf16 %v1712, %v1711
        %v1731 = vpack.c.bf16 %v1714, %v1713
        %v1732 = vpack.c.bf16 %v1716, %v1715
        %v1733 = vld [vmem:[%s3] sm:$0xf]
        %v1734 = vld [vmem:[%s3 + $0x4] sm:$0xf]
        %v1735 = vld [vmem:[%s3 + $0x8] sm:$0xf]
        %v1736 = vld [vmem:[%s3 + $0xc] sm:$0xf]
        %v1737 = vld [vmem:[%s3 + $0x10] sm:$0x3]
        %v1743 = vunpack.c.l.b16 %v1733
        %v1744 = vunpack.c.l.b16 %v1734
        %v1745 = vunpack.c.l.b16 %v1735
        %v1746 = vunpack.c.l.b16 %v1736
        %v1747 = vunpack.c.l.b16 %v1737
        %v1748 = vpack.c.b16 %v1744, %v1743
        %v1749 = vpack.c.b16 %v1746, %v1745
        %v1750 = vpack.c.b16 %v1747, %v1747
        %vm1753 = vcmask 293888
        %v1755 = vsel %vm1753, %v1717, 0
        %v1758 = vsel %vm1753, %v1718, 0
        %v1761 = vsel %vm1753, %v1719, 0
        %v1764 = vsel %vm1753, %v1720, 0
        %v1767 = vsel %vm1753, %v1721, 0
        %v1770 = vsel %vm1753, %v1722, 0
        %v1773 = vsel %vm1753, %v1723, 0
        %v1776 = vsel %vm1753, %v1724, 0
        %v1779 = vsel %vm1753, %v1725, 0
        %v1782 = vsel %vm1753, %v1726, 0
        %v1785 = vsel %vm1753, %v1727, 0
        %v1788 = vsel %vm1753, %v1728, 0
        %v1791 = vsel %vm1753, %v1729, 0
        %v1794 = vsel %vm1753, %v1730, 0
        %v1797 = vsel %vm1753, %v1731, 0
        %v1800 = vsel %vm1753, %v1732, 0
        %vm1802 = vcmask 1041408
        %v1804 = vsel %vm1802, %v1750, 0
        %1806 = vmatprep.subr.bf16.mxu0 0
        %1807 = vmatpush1.bf16.msra.mxu0 0
        %1808 = vmatprep.subr.bf16.mxu0 0
        %1809 = vmatpush1.bf16.msra.mxu0 0
        %1810 = vmatprep.subr.bf16.mxu0 0
        %1811 = vmatpush1.bf16.msra.mxu0 0
        %1812 = vmatprep.subr.bf16.mxu0 0
        %1813 = vmatpush1.bf16.msra.mxu0 0
        %1814 = vmatprep.subr.bf16.mxu0 0
        %1815 = vmatpush1.bf16.msra.mxu0 0
        %1816 = vmatprep.subr.bf16.mxu0 0
        %1817 = vmatpush1.bf16.msra.mxu0 %v1804
        %1818 = vmatprep.subr.bf16.mxu0 0
        %1819 = vmatpush1.bf16.msra.mxu0 %v1749
        %1820 = vmatprep.subr.bf16.mxu0 0
        %1821 = vmatpush1.bf16.msra.mxu0 %v1748
        %1822 = vmatprep.subr.bf16.mxu0 0
        %1823 = vmatpush2.bf16.msra.mxu0 0
        %1824 = vmatprep.subr.bf16.mxu0 0
        %1825 = vmatpush2.bf16.msra.mxu0 0
        %1826 = vmatprep.subr.bf16.mxu0 0
        %1827 = vmatpush2.bf16.msra.mxu0 0
        %1828 = vmatprep.subr.bf16.mxu0 0
        %1829 = vmatpush2.bf16.msra.mxu0 0
        %1830 = vmatprep.subr.bf16.mxu0 0
        %1831 = vmatpush2.bf16.msra.mxu0 0
        %1832 = vmatprep.subr.bf16.mxu0 0
        %1833 = vmatpush2.bf16.msra.mxu0 0
        %1834 = vmatprep.subr.bf16.mxu0 0
        %1835 = vmatpush2.bf16.msra.mxu0 0
        %1836 = vmatprep.subr.bf16.mxu0 0
        %1837 = vmatpush2.bf16.msra.mxu0 0
        %1838 = vmatprep.mubr.bf16.mxu0 0
        %1839 = vmatmul.mubr.bf16.gmra.mxu0 %v1755
        %v1840 = vpop.f32.mrf.mxu0
        %v1841 = vadd.f32 0.0, %v1840
        %v1842 = vpop.f32.mrf.mxu0
        %v1843 = vpop.f32.mrf.mxu0
        %v1844 = vadd.f32 0.0, %v1843
        %v1845 = vpop.f32.mrf.mxu0
        %1846 = vmatprep.mubr.bf16.mxu0 0
        %1847 = vmatmul.mubr.bf16.gmra.mxu0 %v1758
        %v1848 = vpop.f32.mrf.mxu0
        %v1849 = vadd.f32 0.0, %v1848
        %v1850 = vpop.f32.mrf.mxu0
        %v1851 = vpop.f32.mrf.mxu0
        %v1852 = vadd.f32 0.0, %v1851
        %v1853 = vpop.f32.mrf.mxu0
        %1854 = vmatprep.mubr.bf16.mxu0 0
        %1855 = vmatmul.mubr.bf16.gmra.mxu0 %v1761
        %v1856 = vpop.f32.mrf.mxu0
        %v1857 = vadd.f32 0.0, %v1856
        %v1858 = vpop.f32.mrf.mxu0
        %v1859 = vpop.f32.mrf.mxu0
        %v1860 = vadd.f32 0.0, %v1859
        %v1861 = vpop.f32.mrf.mxu0
        %1862 = vmatprep.mubr.bf16.mxu0 0
        %1863 = vmatmul.mubr.bf16.gmra.mxu0 %v1764
        %v1864 = vpop.f32.mrf.mxu0
        %v1865 = vadd.f32 0.0, %v1864
        %v1866 = vpop.f32.mrf.mxu0
        %v1867 = vpop.f32.mrf.mxu0
        %v1868 = vadd.f32 0.0, %v1867
        %v1869 = vpop.f32.mrf.mxu0
        %1870 = vmatprep.mubr.bf16.mxu0 0
        %1871 = vmatmul.mubr.bf16.gmra.mxu0 %v1767
        %v1872 = vpop.f32.mrf.mxu0
        %v1873 = vadd.f32 0.0, %v1872
        %v1874 = vpop.f32.mrf.mxu0
        %v1875 = vpop.f32.mrf.mxu0
        %v1876 = vadd.f32 0.0, %v1875
        %v1877 = vpop.f32.mrf.mxu0
        %1878 = vmatprep.mubr.bf16.mxu0 0
        %1879 = vmatmul.mubr.bf16.gmra.mxu0 %v1770
        %v1880 = vpop.f32.mrf.mxu0
        %v1881 = vadd.f32 0.0, %v1880
        %v1882 = vpop.f32.mrf.mxu0
        %v1883 = vpop.f32.mrf.mxu0
        %v1884 = vadd.f32 0.0, %v1883
        %v1885 = vpop.f32.mrf.mxu0
        %1886 = vmatprep.mubr.bf16.mxu0 0
        %1887 = vmatmul.mubr.bf16.gmra.mxu0 %v1773
        %v1888 = vpop.f32.mrf.mxu0
        %v1889 = vadd.f32 0.0, %v1888
        %v1890 = vpop.f32.mrf.mxu0
        %v1891 = vpop.f32.mrf.mxu0
        %v1892 = vadd.f32 0.0, %v1891
        %v1893 = vpop.f32.mrf.mxu0
        %1894 = vmatprep.mubr.bf16.mxu0 0
        %1895 = vmatmul.mubr.bf16.gmra.mxu0 %v1776
        %v1896 = vpop.f32.mrf.mxu0
        %v1897 = vadd.f32 0.0, %v1896
        %v1898 = vpop.f32.mrf.mxu0
        %v1899 = vpop.f32.mrf.mxu0
        %v1900 = vadd.f32 0.0, %v1899
        %v1901 = vpop.f32.mrf.mxu0
        %1902 = vmatprep.mubr.bf16.mxu0 0
        %1903 = vmatmul.mubr.bf16.gmra.mxu0 %v1779
        %v1904 = vpop.f32.mrf.mxu0
        %v1905 = vadd.f32 0.0, %v1904
        %v1906 = vpop.f32.mrf.mxu0
        %v1907 = vpop.f32.mrf.mxu0
        %v1908 = vadd.f32 0.0, %v1907
        %v1909 = vpop.f32.mrf.mxu0
        %1910 = vmatprep.mubr.bf16.mxu0 0
        %1911 = vmatmul.mubr.bf16.gmra.mxu0 %v1782
        %v1912 = vpop.f32.mrf.mxu0
        %v1913 = vadd.f32 0.0, %v1912
        %v1914 = vpop.f32.mrf.mxu0
        %v1915 = vpop.f32.mrf.mxu0
        %v1916 = vadd.f32 0.0, %v1915
        %v1917 = vpop.f32.mrf.mxu0
        %1918 = vmatprep.mubr.bf16.mxu0 0
        %1919 = vmatmul.mubr.bf16.gmra.mxu0 %v1785
        %v1920 = vpop.f32.mrf.mxu0
        %v1921 = vadd.f32 0.0, %v1920
        %v1922 = vpop.f32.mrf.mxu0
        %v1923 = vpop.f32.mrf.mxu0
        %v1924 = vadd.f32 0.0, %v1923
        %v1925 = vpop.f32.mrf.mxu0
        %1926 = vmatprep.mubr.bf16.mxu0 0
        %1927 = vmatmul.mubr.bf16.gmra.mxu0 %v1788
        %v1928 = vpop.f32.mrf.mxu0
        %v1929 = vadd.f32 0.0, %v1928
        %v1930 = vpop.f32.mrf.mxu0
        %v1931 = vpop.f32.mrf.mxu0
        %v1932 = vadd.f32 0.0, %v1931
        %v1933 = vpop.f32.mrf.mxu0
        %1934 = vmatprep.mubr.bf16.mxu0 0
        %1935 = vmatmul.mubr.bf16.gmra.mxu0 %v1791
        %v1936 = vpop.f32.mrf.mxu0
        %v1937 = vadd.f32 0.0, %v1936
        %v1938 = vpop.f32.mrf.mxu0
        %v1939 = vpop.f32.mrf.mxu0
        %v1940 = vadd.f32 0.0, %v1939
        %v1941 = vpop.f32.mrf.mxu0
        %1942 = vmatprep.mubr.bf16.mxu0 0
        %1943 = vmatmul.mubr.bf16.gmra.mxu0 %v1794
        %v1944 = vpop.f32.mrf.mxu0
        %v1945 = vadd.f32 0.0, %v1944
        %v1946 = vpop.f32.mrf.mxu0
        %v1947 = vpop.f32.mrf.mxu0
        %v1948 = vadd.f32 0.0, %v1947
        %v1949 = vpop.f32.mrf.mxu0
        %1950 = vmatprep.mubr.bf16.mxu0 0
        %1951 = vmatmul.mubr.bf16.gmra.mxu0 %v1797
        %v1952 = vpop.f32.mrf.mxu0
        %v1953 = vadd.f32 0.0, %v1952
        %v1954 = vpop.f32.mrf.mxu0
        %v1955 = vpop.f32.mrf.mxu0
        %v1956 = vadd.f32 0.0, %v1955
        %v1957 = vpop.f32.mrf.mxu0
        %1958 = vmatprep.mubr.bf16.mxu0 0
        %1959 = vmatmul.mubr.bf16.gmra.mxu0 %v1800
        %v1960 = vpop.f32.mrf.mxu0
        %v1961 = vadd.f32 0.0, %v1960
        %v1962 = vpop.f32.mrf.mxu0
        %v1963 = vpop.f32.mrf.mxu0
        %v1964 = vadd.f32 0.0, %v1963
        %v1965 = vpop.f32.mrf.mxu0
        %1966 = vdwg.mxu0
        %1967 = vst [vmem:[%s220] sm:$0xff] %v1841
        %1968 = vst [vmem:[%s220 + $0x8] sm:$0xff] %v1844
        %1969 = vst [vmem:[%s220 + $0x10] sm:$0xff] %v1849
        %1970 = vst [vmem:[%s220 + $0x18] sm:$0xff] %v1852
        %1971 = vst [vmem:[%s220 + $0x20] sm:$0xff] %v1857
        %1972 = vst [vmem:[%s220 + $0x28] sm:$0xff] %v1860
        %1973 = vst [vmem:[%s220 + $0x30] sm:$0xff] %v1865
        %1974 = vst [vmem:[%s220 + $0x38] sm:$0xff] %v1868
        %1975 = vst [vmem:[%s220 + $0x40] sm:$0xff] %v1873
        %1976 = vst [vmem:[%s220 + $0x48] sm:$0xff] %v1876
        %1977 = vst [vmem:[%s220 + $0x50] sm:$0xff] %v1881
        %1978 = vst [vmem:[%s220 + $0x58] sm:$0xff] %v1884
        %1979 = vst [vmem:[%s220 + $0x60] sm:$0xff] %v1889
        %1980 = vst [vmem:[%s220 + $0x68] sm:$0xff] %v1892
        %1981 = vst [vmem:[%s220 + $0x70] sm:$0xff] %v1897
        %1982 = vst [vmem:[%s220 + $0x78] sm:$0xff] %v1900
        %1983 = vst [vmem:[%s220 + $0x80] sm:$0xff] %v1905
        %1984 = vst [vmem:[%s220 + $0x88] sm:$0xff] %v1908
        %1985 = vst [vmem:[%s220 + $0x90] sm:$0xff] %v1913
        %1986 = vst [vmem:[%s220 + $0x98] sm:$0xff] %v1916
        %1987 = vst [vmem:[%s220 + $0xa0] sm:$0xff] %v1921
        %1988 = vst [vmem:[%s220 + $0xa8] sm:$0xff] %v1924
        %1989 = vst [vmem:[%s220 + $0xb0] sm:$0xff] %v1929
        %1990 = vst [vmem:[%s220 + $0xb8] sm:$0xff] %v1932
        %1991 = vst [vmem:[%s220 + $0xc0] sm:$0xff] %v1937
        %1992 = vst [vmem:[%s220 + $0xc8] sm:$0xff] %v1940
        %1993 = vst [vmem:[%s220 + $0xd0] sm:$0xff] %v1945
        %1994 = vst [vmem:[%s220 + $0xd8] sm:$0xff] %v1948
        %1995 = vst [vmem:[%s220 + $0xe0] sm:$0xff] %v1953
        %1996 = vst [vmem:[%s220 + $0xe8] sm:$0xff] %v1956
        %1997 = vst [vmem:[%s220 + $0xf0] sm:$0xff] %v1961
        %1998 = vst [vmem:[%s220 + $0xf8] sm:$0xff] %v1964
        %s1999 = sand.u32 %s125, 1
        %s2000 = scalar_lea.sflag [#allocation4], %s1999
        %s2001 = sand.u32 %s125, 1
        %s2002 = smul.addr %s2001, 256
        %s2003 = scalar_lea.vmem [#allocation3], %s2002
        // Predicated region
        $region37: #{tpu_custom_call.1} parent=35 // pred_check
          %p2004 = pneg %p135
        $region38: #{tpu_custom_call.1} parent=35 // pred_check_branch
          %2006 = sbr.rel (%p2004) target = $region40
        $region39: #{tpu_custom_call.1} parent=35 // pred_region
          %s2008 = ssub.s32 4096, 4096
          %2009 = vsyncadd %s2000, %s2008
          %s2010 = smul.addr %s18, 32
          %s2011 = smul.addr %s2010, 128
          %s2012 = scalar_lea.hbm %s4, %s2011
          %s2013 = sshll.u32 %s2003, 4
          %s2014 = int_to_ptr.vmem [resolvable:$true] %s2013
          %2019 = dma.vmem_to_hbm [thread:$0]  %s2014, 4096, %s2012, %s2000, 128, 128, 8
        $region40: #{tpu_custom_call.1} parent=35 // pred_fallthru
          _
      $region36: #{tpu_custom_call.1} parent=5 // pred_fallthru
        _
      %p2020 = scmp.le.s32.totalorder 2, %s13
      // Predicated region
      $region41: #{tpu_custom_call.1} parent=5 // pred_check
        %p2021 = pneg %p2020
      $region42: #{tpu_custom_call.1} parent=5 // pred_check_branch
        %2023 = sbr.rel (%p2021) target = $region44
      $region43: #{tpu_custom_call.1} parent=5 // pred_region
        %s2024 = ssub.s32 %s13, 2
        // Predicated region
        $region45: #{tpu_custom_call.1} parent=43 // pred_check
          %p2025 = pneg %p141
        $region46: #{tpu_custom_call.1} parent=43 // pred_check_branch
          %2027 = sbr.rel (%p2025) target = $region48
        $region47: #{tpu_custom_call.1} parent=43 // pred_region
          %s2028 = sand.u32 %s126, 1
          %s2029 = scalar_lea.sflag [#allocation4], %s2028
          %s2030 = sand.u32 %s126, 1
          %s2031 = smul.addr %s2030, 256
          %s2032 = scalar_lea.vmem [#allocation3], %s2031
          %2033 = dma.done %s2029, 4096
        $region48: #{tpu_custom_call.1} parent=43 // pred_fallthru
          _
      $region44: #{tpu_custom_call.1} parent=5 // pred_fallthru
        _
    $region6: #{tpu_custom_call.1} parent=1 // loop_footer
      %s17 = sadd.s32 1, %s13
    $region7: #{tpu_custom_call.1} parent=1 // loop_footer_branch
      %12 = sbr.rel target = $region3
    $region8: #{tpu_custom_call.1} parent=1 // loop_exit
      _
    %2034 = vsyncpa [#allocation4], 1
    %s2035 = scalar_lea.sflag [#allocation4], 1
    %2036 = vsyncpa %s2035, 1

</llo_original>
